<compile_context>
chip_gen: v5e
topology: v5e:2x2
jax: 0.10.0
libtpu: 0.0.40
codegen_flags: <defaults>
</compile_context>

<pallas_src>
import math
import functools

import jax
import jax.numpy as jnp
from jax.experimental import pallas as pl
from jax.experimental.pallas import tpu as pltpu


def _mha_kernel(xq_ref, xk_ref, xv_ref,
                wq_ref, bq_ref, wk_ref, bk_ref,
                wv_ref, bv_ref, wo_ref, bo_ref,
                out_ref,
                q_scr, m_scr, l_scr, acc_scr,
                *, h, d_k):
    ki = pl.program_id(2)
    nk = pl.num_programs(2)

    # --- init: project the q tile once per (batch, q_tile), reset accumulators.
    @pl.when(ki == 0)
    def _init():
        xq = xq_ref[0]                                            # (TQ, D)
        # Wq / bq already carry the 1/sqrt(d_k) scale (folded on host).
        q = jnp.dot(xq, wq_ref[...],
                    preferred_element_type=jnp.float32) + bq_ref[0]
        q_scr[...] = q.astype(q_scr.dtype)
        m_scr[...] = jnp.full_like(m_scr, -jnp.inf)
        l_scr[...] = jnp.zeros_like(l_scr)
        acc_scr[...] = jnp.zeros_like(acc_scr)

    # --- project the current k/v tile (weights pre-transposed: no `.T`).
    xk = xk_ref[0]                                                # (TK, D)
    xv = xv_ref[0]
    k = (jnp.dot(xk, wk_ref[...], preferred_element_type=jnp.float32)
         + bk_ref[0]).astype(xk.dtype)
    v = (jnp.dot(xv, wv_ref[...], preferred_element_type=jnp.float32)
         + bv_ref[0]).astype(xv.dtype)

    # --- per-head online softmax; heads are static lane slices (no transpose).
    for hd in range(h):
        sl = slice(hd * d_k, (hd + 1) * d_k)
        qh = q_scr[:, sl]                                         # (TQ, d_k)
        kh = k[:, sl]                                             # (TK, d_k)
        vh = v[:, sl]

        # scores = qh @ kh.T without materializing a transpose.
        s = jax.lax.dot_general(qh, kh, (((1,), (1,)), ((), ())),
                                preferred_element_type=jnp.float32)  # (TQ, TK)

        m_prev = m_scr[:, hd:hd + 1]                              # (TQ, 1)
        l_prev = l_scr[:, hd:hd + 1]
        m_new = jnp.maximum(m_prev, jnp.max(s, axis=-1, keepdims=True))
        alpha = jnp.exp(m_prev - m_new)
        p = jnp.exp(s - m_new)

        l_scr[:, hd:hd + 1] = alpha * l_prev + jnp.sum(p, axis=-1, keepdims=True)
        acc_scr[:, sl] = alpha * acc_scr[:, sl] + jnp.dot(
            p.astype(vh.dtype), vh, preferred_element_type=jnp.float32)
        m_scr[:, hd:hd + 1] = m_new

    # --- finalize: normalize, merge heads (already lane-contiguous), project.
    @pl.when(ki == nk - 1)
    def _finalize():
        for hd in range(h):
            sl = slice(hd * d_k, (hd + 1) * d_k)
            # approx=True would move the divide to the EUP slot; kept exact
            # here so the demo matches the f32 reference tightly.
            inv_l = pl.reciprocal(l_scr[:, hd:hd + 1], approx=False)
            acc_scr[:, sl] = acc_scr[:, sl] * inv_l
        ctx = acc_scr[...].astype(wo_ref.dtype)                   # (TQ, D)
        out = jnp.dot(ctx, wo_ref[...],
                      preferred_element_type=jnp.float32) + bo_ref[0]
        out_ref[0] = out.astype(out_ref.dtype)                    # lane-dense store


def multi_headed_attention(query, key, value, params, *, h,
                           q_tile=128, kv_tile=128):
    """query/key/value: (B, S, d_model). params: Wq,bq,Wk,bk,Wv,bv,Wo,bo
    (PyTorch nn.Linear convention: W is (out, in))."""
    B, Sq, D = query.shape
    _, Skv, _ = key.shape
    assert D % h == 0
    d_k = D // h
    scale = 1.0 / math.sqrt(d_k)

    # Host-side prep: pre-transpose weights to (in, out); fold the attention
    # scale into the q projection. (Q/K/V come from different tensors in this
    # module's API, so the three projections cannot be fused into one matmul.)
    wq_t = params['Wq'].T * scale
    wk_t = params['Wk'].T
    wv_t = params['Wv'].T
    wo_t = params['Wo'].T
    bq = (params['bq'] * scale).reshape(1, D)
    bk = params['bk'].reshape(1, D)
    bv = params['bv'].reshape(1, D)
    bo = params['bo'].reshape(1, D)

    TQ = min(q_tile, Sq)
    TK = min(kv_tile, Skv)
    assert Sq % TQ == 0 and Skv % TK == 0, "seq len must divide the tile size"
    nq, nk = Sq // TQ, Skv // TK

    q_spec   = pl.BlockSpec((1, TQ, D), lambda b, qi, ki: (b, qi, 0))
    kv_spec  = pl.BlockSpec((1, TK, D), lambda b, qi, ki: (b, ki, 0))
    w_spec   = pl.BlockSpec((D, D),     lambda b, qi, ki: (0, 0))
    b_spec   = pl.BlockSpec((1, D),     lambda b, qi, ki: (0, 0))
    out_spec = pl.BlockSpec((1, TQ, D), lambda b, qi, ki: (b, qi, 0))

    kernel = functools.partial(_mha_kernel, h=h, d_k=d_k)

    return pl.pallas_call(
        kernel,
        out_shape=jax.ShapeDtypeStruct((B, Sq, D), query.dtype),
        grid_spec=pltpu.PrefetchScalarGridSpec(
            num_scalar_prefetch=0,
            grid=(B, nq, nk),
            in_specs=[q_spec, kv_spec, kv_spec,
                      w_spec, b_spec, w_spec, b_spec,
                      w_spec, b_spec, w_spec, b_spec],
            out_specs=out_spec,
            scratch_shapes=[
                pltpu.VMEM((TQ, D), query.dtype),   # projected q tile (scaled)
                pltpu.VMEM((TQ, h), jnp.float32),   # running max per head
                pltpu.VMEM((TQ, h), jnp.float32),   # running sum per head
                pltpu.VMEM((TQ, D), jnp.float32),   # output accumulator
            ]),
        compiler_params=pltpu.CompilerParams(
            dimension_semantics=("parallel", "parallel", "arbitrary")),
    )(query, key, value,
      wq_t, bq, wk_t, bk, wv_t, bv, wo_t, bo)


def _reference(query, key, value, params, *, h):
    """Plain-JAX reference mirroring the PyTorch module."""
    B, S, D = query.shape
    d_k = D // h

    def lin(x, W, b):
        return x @ W.T + b

    q = lin(query, params['Wq'], params['bq']).reshape(B, -1, h, d_k).transpose(0, 2, 1, 3)
    k = lin(key,   params['Wk'], params['bk']).reshape(B, -1, h, d_k).transpose(0, 2, 1, 3)
    v = lin(value, params['Wv'], params['bv']).reshape(B, -1, h, d_k).transpose(0, 2, 1, 3)

    scores = jnp.einsum('bhqd,bhkd->bhqk', q, k) / math.sqrt(d_k)
    p = jax.nn.softmax(scores, axis=-1)
    x = jnp.einsum('bhqk,bhkd->bhqd', p, v)
    x = x.transpose(0, 2, 1, 3).reshape(B, -1, D)
    return lin(x, params['Wo'], params['bo'])


def _make_params(key, D):
    keys = jax.random.split(key, 8)

    def init_w(k):
        return jax.random.normal(k, (D, D), jnp.float32) * 0.05

    def init_b(k):
        return jax.random.normal(k, (D,), jnp.float32) * 0.01

    return {
        'Wq': init_w(keys[0]), 'bq': init_b(keys[1]),
        'Wk': init_w(keys[2]), 'bk': init_b(keys[3]),
        'Wv': init_w(keys[4]), 'bv': init_b(keys[5]),
        'Wo': init_w(keys[6]), 'bo': init_b(keys[7]),
    }


if __name__ == "__main__":
    root = jax.random.PRNGKey(0)
    pkey, dkey = jax.random.split(root)

    # --- main config (module-sized demo): batch=2, seq=8, d_model=32, heads=4
    B, S, D, H = 2, 8, 32, 4
    params = _make_params(pkey, D)
    k1, k2, k3, k4, k5, k6 = jax.random.split(dkey, 6)

    query = jax.random.normal(k1, (B, S, D), jnp.float32)
    key_in = jax.random.normal(k2, (B, S, D), jnp.float32)
    value = jax.random.normal(k3, (B, S, D), jnp.float32)

    out = multi_headed_attention(query, key_in, value, params, h=H)
    out = jax.block_until_ready(out)
    ref = _reference(query, key_in, value, params, h=H)
    assert out.shape == (B, S, D)
    assert jnp.allclose(out, ref, atol=2e-4, rtol=2e-4), "mismatch vs reference"

    # --- second config exercising the multi-tile online-softmax path
    B2, S2 = 1, 16
    q2 = jax.random.normal(k4, (B2, S2, D), jnp.float32)
    k2_in = jax.random.normal(k5, (B2, S2, D), jnp.float32)
    v2 = jax.random.normal(k6, (B2, S2, D), jnp.float32)
    out2 = multi_headed_attention(q2, k2_in, v2, params, h=H,
                                  q_tile=8, kv_tile=8)   # grid = (1, 2, 2)
    out2 = jax.block_until_ready(out2)
    ref2 = _reference(q2, k2_in, v2, params, h=H)
    assert jnp.allclose(out2, ref2, atol=2e-4, rtol=2e-4), "tiled mismatch"

    # TODO(synk): dropout(p>0) and exposing the attention matrix (self.attn)
    # are not part of this forward-output kernel (p=0.0 -> identity here).
    print("KERNEL_OK")
</pallas_src>

<mosaic_0001>
module attributes {stable_mosaic.version = 11 : i64} {
  func.func @_mha_kernel(%arg0: i32, %arg1: i32, %arg2: i32, %arg3: memref<1x8x32xf32, #tpu.memory_space<vmem>>, %arg4: memref<1x8x32xf32, #tpu.memory_space<vmem>>, %arg5: memref<1x8x32xf32, #tpu.memory_space<vmem>>, %arg6: memref<32x32xf32, #tpu.memory_space<vmem>>, %arg7: memref<1x32xf32, #tpu.memory_space<vmem>>, %arg8: memref<32x32xf32, #tpu.memory_space<vmem>>, %arg9: memref<1x32xf32, #tpu.memory_space<vmem>>, %arg10: memref<32x32xf32, #tpu.memory_space<vmem>>, %arg11: memref<1x32xf32, #tpu.memory_space<vmem>>, %arg12: memref<32x32xf32, #tpu.memory_space<vmem>>, %arg13: memref<1x32xf32, #tpu.memory_space<vmem>>, %arg14: memref<1x8x32xf32, #tpu.memory_space<vmem>>, %arg15: memref<8x32xf32, #tpu.memory_space<vmem>>, %arg16: memref<8x4xf32, #tpu.memory_space<vmem>>, %arg17: memref<8x4xf32, #tpu.memory_space<vmem>>, %arg18: memref<8x32xf32, #tpu.memory_space<vmem>>) attributes {dimension_semantics = [#tpu.dimension_semantics<parallel>, #tpu.dimension_semantics<parallel>, #tpu.dimension_semantics<arbitrary>], iteration_bounds = array<i64: 2, 1, 1>, scalar_prefetch = 0 : i64, scratch_operands = 4 : i64, tpu.core_type = #tpu.core_type<tc>, window_params = [{transform_indices = @transform_0, window_bounds = array<i64: 1, 8, 32>}, {transform_indices = @transform_1, window_bounds = array<i64: 1, 8, 32>}, {transform_indices = @transform_2, window_bounds = array<i64: 1, 8, 32>}, {pipeline_mode = #tpu.pipeline_mode<synchronous>, transform_indices = @transform_3, window_bounds = array<i64: 32, 32>}, {pipeline_mode = #tpu.pipeline_mode<synchronous>, transform_indices = @transform_4, window_bounds = array<i64: 1, 32>}, {pipeline_mode = #tpu.pipeline_mode<synchronous>, transform_indices = @transform_5, window_bounds = array<i64: 32, 32>}, {pipeline_mode = #tpu.pipeline_mode<synchronous>, transform_indices = @transform_6, window_bounds = array<i64: 1, 32>}, {pipeline_mode = #tpu.pipeline_mode<synchronous>, transform_indices = @transform_7, window_bounds = array<i64: 32, 32>}, {pipeline_mode = #tpu.pipeline_mode<synchronous>, transform_indices = @transform_8, window_bounds = array<i64: 1, 32>}, {pipeline_mode = #tpu.pipeline_mode<synchronous>, transform_indices = @transform_9, window_bounds = array<i64: 32, 32>}, {pipeline_mode = #tpu.pipeline_mode<synchronous>, transform_indices = @transform_10, window_bounds = array<i64: 1, 32>}, {transform_indices = @transform_11, window_bounds = array<i64: 1, 8, 32>}]} {
    %c0_i32 = arith.constant 0 : i32
    %0 = arith.cmpi eq, %arg2, %c0_i32 : i32
    %1 = arith.extui %0 : i1 to i32
    %c0_i32_0 = arith.constant 0 : i32
    %2 = arith.cmpi ne, %1, %c0_i32_0 : i32
    scf.if %2 {
      %c0_83 = arith.constant 0 : index
      %c0_84 = arith.constant 0 : index
      %c0_85 = arith.constant 0 : index
      %128 = vector.load %arg3[%c0_83, %c0_84, %c0_85] : memref<1x8x32xf32, #tpu.memory_space<vmem>>, vector<1x8x32xf32>
      %129 = vector.shape_cast %128 : vector<1x8x32xf32> to vector<8x32xf32>
      %c0_86 = arith.constant 0 : index
      %c0_87 = arith.constant 0 : index
      %130 = vector.load %arg6[%c0_86, %c0_87] : memref<32x32xf32, #tpu.memory_space<vmem>>, vector<32x32xf32>
      %cst_88 = arith.constant dense<0.000000e+00> : vector<8x32xf32>
      %131 = tpu.matmul %129, %130, %cst_88 {dimension_numbers = #tpu.dot_dimension_numbers<[1], [0], [0], [1], [0, 0, 1, 1], [], []>} : vector<8x32xf32>, vector<32x32xf32>, vector<8x32xf32> -> vector<8x32xf32>
      %c0_89 = arith.constant 0 : index
      %c0_90 = arith.constant 0 : index
      %132 = vector.load %arg7[%c0_89, %c0_90] : memref<1x32xf32, #tpu.memory_space<vmem>>, vector<1x32xf32>
      %133 = vector.shape_cast %132 : vector<1x32xf32> to vector<32xf32>
      %134 = vector.shape_cast %133 : vector<32xf32> to vector<1x32xf32>
      %135 = vector.broadcast %134 : vector<1x32xf32> to vector<8x32xf32>
      %136 = arith.addf %131, %135 : vector<8x32xf32>
      %c0_91 = arith.constant 0 : index
      %c0_92 = arith.constant 0 : index
      %137 = vector.load %arg15[%c0_91, %c0_92] : memref<8x32xf32, #tpu.memory_space<vmem>>, vector<8x32xf32>
      tpu.vector_store %arg15[%c0_91, %c0_92], %136 {strides = array<i32>} : memref<8x32xf32, #tpu.memory_space<vmem>>, vector<8x32xf32>,
      %cst_93 = arith.constant 0xFF800000 : f32
      %138 = vector.broadcast %cst_93 : f32 to vector<8x4xf32>
      %c0_94 = arith.constant 0 : index
      %c0_95 = arith.constant 0 : index
      %139 = vector.load %arg16[%c0_94, %c0_95] : memref<8x4xf32, #tpu.memory_space<vmem>>, vector<8x4xf32>
      tpu.vector_store %arg16[%c0_94, %c0_95], %138 {strides = array<i32>} : memref<8x4xf32, #tpu.memory_space<vmem>>, vector<8x4xf32>,
      %cst_96 = arith.constant 0.000000e+00 : f32
      %140 = vector.broadcast %cst_96 : f32 to vector<8x4xf32>
      %c0_97 = arith.constant 0 : index
      %c0_98 = arith.constant 0 : index
      %141 = vector.load %arg17[%c0_97, %c0_98] : memref<8x4xf32, #tpu.memory_space<vmem>>, vector<8x4xf32>
      tpu.vector_store %arg17[%c0_97, %c0_98], %140 {strides = array<i32>} : memref<8x4xf32, #tpu.memory_space<vmem>>, vector<8x4xf32>,
      %cst_99 = arith.constant 0.000000e+00 : f32
      %142 = vector.broadcast %cst_99 : f32 to vector<8x32xf32>
      %c0_100 = arith.constant 0 : index
      %c0_101 = arith.constant 0 : index
      %143 = vector.load %arg18[%c0_100, %c0_101] : memref<8x32xf32, #tpu.memory_space<vmem>>, vector<8x32xf32>
      tpu.vector_store %arg18[%c0_100, %c0_101], %142 {strides = array<i32>} : memref<8x32xf32, #tpu.memory_space<vmem>>, vector<8x32xf32>,
    } else {
    }
    %c0 = arith.constant 0 : index
    %c0_1 = arith.constant 0 : index
    %c0_2 = arith.constant 0 : index
    %3 = vector.load %arg4[%c0, %c0_1, %c0_2] : memref<1x8x32xf32, #tpu.memory_space<vmem>>, vector<1x8x32xf32>
    %4 = vector.shape_cast %3 : vector<1x8x32xf32> to vector<8x32xf32>
    %c0_3 = arith.constant 0 : index
    %c0_4 = arith.constant 0 : index
    %c0_5 = arith.constant 0 : index
    %5 = vector.load %arg5[%c0_3, %c0_4, %c0_5] : memref<1x8x32xf32, #tpu.memory_space<vmem>>, vector<1x8x32xf32>
    %6 = vector.shape_cast %5 : vector<1x8x32xf32> to vector<8x32xf32>
    %c0_6 = arith.constant 0 : index
    %c0_7 = arith.constant 0 : index
    %7 = vector.load %arg8[%c0_6, %c0_7] : memref<32x32xf32, #tpu.memory_space<vmem>>, vector<32x32xf32>
    %cst = arith.constant dense<0.000000e+00> : vector<8x32xf32>
    %8 = tpu.matmul %4, %7, %cst {dimension_numbers = #tpu.dot_dimension_numbers<[1], [0], [0], [1], [0, 0, 1, 1], [], []>} : vector<8x32xf32>, vector<32x32xf32>, vector<8x32xf32> -> vector<8x32xf32>
    %c0_8 = arith.constant 0 : index
    %c0_9 = arith.constant 0 : index
    %9 = vector.load %arg9[%c0_8, %c0_9] : memref<1x32xf32, #tpu.memory_space<vmem>>, vector<1x32xf32>
    %10 = vector.shape_cast %9 : vector<1x32xf32> to vector<32xf32>
    %11 = vector.shape_cast %10 : vector<32xf32> to vector<1x32xf32>
    %12 = vector.broadcast %11 : vector<1x32xf32> to vector<8x32xf32>
    %13 = arith.addf %8, %12 : vector<8x32xf32>
    %c0_10 = arith.constant 0 : index
    %c0_11 = arith.constant 0 : index
    %14 = vector.load %arg10[%c0_10, %c0_11] : memref<32x32xf32, #tpu.memory_space<vmem>>, vector<32x32xf32>
    %cst_12 = arith.constant dense<0.000000e+00> : vector<8x32xf32>
    %15 = tpu.matmul %6, %14, %cst_12 {dimension_numbers = #tpu.dot_dimension_numbers<[1], [0], [0], [1], [0, 0, 1, 1], [], []>} : vector<8x32xf32>, vector<32x32xf32>, vector<8x32xf32> -> vector<8x32xf32>
    %c0_13 = arith.constant 0 : index
    %c0_14 = arith.constant 0 : index
    %16 = vector.load %arg11[%c0_13, %c0_14] : memref<1x32xf32, #tpu.memory_space<vmem>>, vector<1x32xf32>
    %17 = vector.shape_cast %16 : vector<1x32xf32> to vector<32xf32>
    %18 = vector.shape_cast %17 : vector<32xf32> to vector<1x32xf32>
    %19 = vector.broadcast %18 : vector<1x32xf32> to vector<8x32xf32>
    %20 = arith.addf %15, %19 : vector<8x32xf32>
    %c0_15 = arith.constant 0 : index
    %c0_16 = arith.constant 0 : index
    %21 = vector.load %arg15[%c0_15, %c0_16] : memref<8x32xf32, #tpu.memory_space<vmem>>, vector<8x8xf32>
    %22 = vector.extract_strided_slice %13 {offsets = [0, 0], sizes = [8, 8], strides = [1, 1]} : vector<8x32xf32> to vector<8x8xf32>
    %23 = vector.extract_strided_slice %20 {offsets = [0, 0], sizes = [8, 8], strides = [1, 1]} : vector<8x32xf32> to vector<8x8xf32>
    %cst_17 = arith.constant dense<0.000000e+00> : vector<8x8xf32>
    %24 = tpu.matmul %21, %22, %cst_17 {dimension_numbers = #tpu.dot_dimension_numbers<[1], [1], [0], [0], [0, 0, 1, 0], [], []>} : vector<8x8xf32>, vector<8x8xf32>, vector<8x8xf32> -> vector<8x8xf32>
    %c0_18 = arith.constant 0 : index
    %c0_19 = arith.constant 0 : index
    %25 = vector.load %arg16[%c0_18, %c0_19] : memref<8x4xf32, #tpu.memory_space<vmem>>, vector<8x1xf32>
    %c0_20 = arith.constant 0 : index
    %c0_21 = arith.constant 0 : index
    %26 = vector.load %arg17[%c0_20, %c0_21] : memref<8x4xf32, #tpu.memory_space<vmem>>, vector<8x1xf32>
    %cst_22 = arith.constant dense<0xFF800000> : vector<8xf32>
    %27 = vector.multi_reduction <maximumf>, %24, %cst_22 [1] : vector<8x8xf32> to vector<8xf32>
    %28 = vector.shape_cast %27 : vector<8xf32> to vector<8x1xf32>
    %29 = arith.maximumf %25, %28 : vector<8x1xf32>
    %30 = arith.subf %25, %29 : vector<8x1xf32>
    %31 = math.exp %30 : vector<8x1xf32>
    %32 = vector.broadcast %29 : vector<8x1xf32> to vector<8x8xf32>
    %33 = arith.subf %24, %32 : vector<8x8xf32>
    %34 = math.exp %33 : vector<8x8xf32>
    %35 = arith.mulf %31, %26 : vector<8x1xf32>
    %cst_23 = arith.constant dense<0.000000e+00> : vector<8xf32>
    %36 = vector.multi_reduction <add>, %34, %cst_23 [1] : vector<8x8xf32> to vector<8xf32>
    %37 = vector.shape_cast %36 : vector<8xf32> to vector<8x1xf32>
    %38 = arith.addf %35, %37 : vector<8x1xf32>
    %c0_24 = arith.constant 0 : index
    %c0_25 = arith.constant 0 : index
    %39 = vector.load %arg17[%c0_24, %c0_25] : memref<8x4xf32, #tpu.memory_space<vmem>>, vector<8x1xf32>
    tpu.vector_store %arg17[%c0_24, %c0_25], %38 {strides = array<i32>} : memref<8x4xf32, #tpu.memory_space<vmem>>, vector<8x1xf32>,
    %c0_26 = arith.constant 0 : index
    %c0_27 = arith.constant 0 : index
    %40 = vector.load %arg18[%c0_26, %c0_27] : memref<8x32xf32, #tpu.memory_space<vmem>>, vector<8x8xf32>
    %41 = vector.broadcast %31 : vector<8x1xf32> to vector<8x8xf32>
    %42 = arith.mulf %41, %40 : vector<8x8xf32>
    %cst_28 = arith.constant dense<0.000000e+00> : vector<8x8xf32>
    %43 = tpu.matmul %34, %23, %cst_28 {dimension_numbers = #tpu.dot_dimension_numbers<[1], [0], [0], [1], [0, 0, 1, 1], [], []>} : vector<8x8xf32>, vector<8x8xf32>, vector<8x8xf32> -> vector<8x8xf32>
    %44 = arith.addf %42, %43 : vector<8x8xf32>
    %c0_29 = arith.constant 0 : index
    %c0_30 = arith.constant 0 : index
    %45 = vector.load %arg18[%c0_29, %c0_30] : memref<8x32xf32, #tpu.memory_space<vmem>>, vector<8x8xf32>
    tpu.vector_store %arg18[%c0_29, %c0_30], %44 {strides = array<i32>} : memref<8x32xf32, #tpu.memory_space<vmem>>, vector<8x8xf32>,
    %c0_31 = arith.constant 0 : index
    %c0_32 = arith.constant 0 : index
    %46 = vector.load %arg16[%c0_31, %c0_32] : memref<8x4xf32, #tpu.memory_space<vmem>>, vector<8x1xf32>
    tpu.vector_store %arg16[%c0_31, %c0_32], %29 {strides = array<i32>} : memref<8x4xf32, #tpu.memory_space<vmem>>, vector<8x1xf32>,
    %c0_33 = arith.constant 0 : index
    %c8 = arith.constant 8 : index
    %47 = vector.load %arg15[%c0_33, %c8] : memref<8x32xf32, #tpu.memory_space<vmem>>, vector<8x8xf32>
    %48 = vector.extract_strided_slice %13 {offsets = [0, 8], sizes = [8, 8], strides = [1, 1]} : vector<8x32xf32> to vector<8x8xf32>
    %49 = vector.extract_strided_slice %20 {offsets = [0, 8], sizes = [8, 8], strides = [1, 1]} : vector<8x32xf32> to vector<8x8xf32>
    %cst_34 = arith.constant dense<0.000000e+00> : vector<8x8xf32>
    %50 = tpu.matmul %47, %48, %cst_34 {dimension_numbers = #tpu.dot_dimension_numbers<[1], [1], [0], [0], [0, 0, 1, 0], [], []>} : vector<8x8xf32>, vector<8x8xf32>, vector<8x8xf32> -> vector<8x8xf32>
    %c0_35 = arith.constant 0 : index
    %c1 = arith.constant 1 : index
    %51 = vector.load %arg16[%c0_35, %c1] : memref<8x4xf32, #tpu.memory_space<vmem>>, vector<8x1xf32>
    %c0_36 = arith.constant 0 : index
    %c1_37 = arith.constant 1 : index
    %52 = vector.load %arg17[%c0_36, %c1_37] : memref<8x4xf32, #tpu.memory_space<vmem>>, vector<8x1xf32>
    %cst_38 = arith.constant dense<0xFF800000> : vector<8xf32>
    %53 = vector.multi_reduction <maximumf>, %50, %cst_38 [1] : vector<8x8xf32> to vector<8xf32>
    %54 = vector.shape_cast %53 : vector<8xf32> to vector<8x1xf32>
    %55 = arith.maximumf %51, %54 : vector<8x1xf32>
    %56 = arith.subf %51, %55 : vector<8x1xf32>
    %57 = math.exp %56 : vector<8x1xf32>
    %58 = vector.broadcast %55 : vector<8x1xf32> to vector<8x8xf32>
    %59 = arith.subf %50, %58 : vector<8x8xf32>
    %60 = math.exp %59 : vector<8x8xf32>
    %61 = arith.mulf %57, %52 : vector<8x1xf32>
    %cst_39 = arith.constant dense<0.000000e+00> : vector<8xf32>
    %62 = vector.multi_reduction <add>, %60, %cst_39 [1] : vector<8x8xf32> to vector<8xf32>
    %63 = vector.shape_cast %62 : vector<8xf32> to vector<8x1xf32>
    %64 = arith.addf %61, %63 : vector<8x1xf32>
    %c0_40 = arith.constant 0 : index
    %c1_41 = arith.constant 1 : index
    %65 = vector.load %arg17[%c0_40, %c1_41] : memref<8x4xf32, #tpu.memory_space<vmem>>, vector<8x1xf32>
    tpu.vector_store %arg17[%c0_40, %c1_41], %64 {strides = array<i32>} : memref<8x4xf32, #tpu.memory_space<vmem>>, vector<8x1xf32>,
    %c0_42 = arith.constant 0 : index
    %c8_43 = arith.constant 8 : index
    %66 = vector.load %arg18[%c0_42, %c8_43] : memref<8x32xf32, #tpu.memory_space<vmem>>, vector<8x8xf32>
    %67 = vector.broadcast %57 : vector<8x1xf32> to vector<8x8xf32>
    %68 = arith.mulf %67, %66 : vector<8x8xf32>
    %cst_44 = arith.constant dense<0.000000e+00> : vector<8x8xf32>
    %69 = tpu.matmul %60, %49, %cst_44 {dimension_numbers = #tpu.dot_dimension_numbers<[1], [0], [0], [1], [0, 0, 1, 1], [], []>} : vector<8x8xf32>, vector<8x8xf32>, vector<8x8xf32> -> vector<8x8xf32>
    %70 = arith.addf %68, %69 : vector<8x8xf32>
    %c0_45 = arith.constant 0 : index
    %c8_46 = arith.constant 8 : index
    %71 = vector.load %arg18[%c0_45, %c8_46] : memref<8x32xf32, #tpu.memory_space<vmem>>, vector<8x8xf32>
    tpu.vector_store %arg18[%c0_45, %c8_46], %70 {strides = array<i32>} : memref<8x32xf32, #tpu.memory_space<vmem>>, vector<8x8xf32>,
    %c0_47 = arith.constant 0 : index
    %c1_48 = arith.constant 1 : index
    %72 = vector.load %arg16[%c0_47, %c1_48] : memref<8x4xf32, #tpu.memory_space<vmem>>, vector<8x1xf32>
    tpu.vector_store %arg16[%c0_47, %c1_48], %55 {strides = array<i32>} : memref<8x4xf32, #tpu.memory_space<vmem>>, vector<8x1xf32>,
    %c0_49 = arith.constant 0 : index
    %c16 = arith.constant 16 : index
    %73 = vector.load %arg15[%c0_49, %c16] : memref<8x32xf32, #tpu.memory_space<vmem>>, vector<8x8xf32>
    %74 = vector.extract_strided_slice %13 {offsets = [0, 16], sizes = [8, 8], strides = [1, 1]} : vector<8x32xf32> to vector<8x8xf32>
    %75 = vector.extract_strided_slice %20 {offsets = [0, 16], sizes = [8, 8], strides = [1, 1]} : vector<8x32xf32> to vector<8x8xf32>
    %cst_50 = arith.constant dense<0.000000e+00> : vector<8x8xf32>
    %76 = tpu.matmul %73, %74, %cst_50 {dimension_numbers = #tpu.dot_dimension_numbers<[1], [1], [0], [0], [0, 0, 1, 0], [], []>} : vector<8x8xf32>, vector<8x8xf32>, vector<8x8xf32> -> vector<8x8xf32>
    %c0_51 = arith.constant 0 : index
    %c2 = arith.constant 2 : index
    %77 = vector.load %arg16[%c0_51, %c2] : memref<8x4xf32, #tpu.memory_space<vmem>>, vector<8x1xf32>
    %c0_52 = arith.constant 0 : index
    %c2_53 = arith.constant 2 : index
    %78 = vector.load %arg17[%c0_52, %c2_53] : memref<8x4xf32, #tpu.memory_space<vmem>>, vector<8x1xf32>
    %cst_54 = arith.constant dense<0xFF800000> : vector<8xf32>
    %79 = vector.multi_reduction <maximumf>, %76, %cst_54 [1] : vector<8x8xf32> to vector<8xf32>
    %80 = vector.shape_cast %79 : vector<8xf32> to vector<8x1xf32>
    %81 = arith.maximumf %77, %80 : vector<8x1xf32>
    %82 = arith.subf %77, %81 : vector<8x1xf32>
    %83 = math.exp %82 : vector<8x1xf32>
    %84 = vector.broadcast %81 : vector<8x1xf32> to vector<8x8xf32>
    %85 = arith.subf %76, %84 : vector<8x8xf32>
    %86 = math.exp %85 : vector<8x8xf32>
    %87 = arith.mulf %83, %78 : vector<8x1xf32>
    %cst_55 = arith.constant dense<0.000000e+00> : vector<8xf32>
    %88 = vector.multi_reduction <add>, %86, %cst_55 [1] : vector<8x8xf32> to vector<8xf32>
    %89 = vector.shape_cast %88 : vector<8xf32> to vector<8x1xf32>
    %90 = arith.addf %87, %89 : vector<8x1xf32>
    %c0_56 = arith.constant 0 : index
    %c2_57 = arith.constant 2 : index
    %91 = vector.load %arg17[%c0_56, %c2_57] : memref<8x4xf32, #tpu.memory_space<vmem>>, vector<8x1xf32>
    tpu.vector_store %arg17[%c0_56, %c2_57], %90 {strides = array<i32>} : memref<8x4xf32, #tpu.memory_space<vmem>>, vector<8x1xf32>,
    %c0_58 = arith.constant 0 : index
    %c16_59 = arith.constant 16 : index
    %92 = vector.load %arg18[%c0_58, %c16_59] : memref<8x32xf32, #tpu.memory_space<vmem>>, vector<8x8xf32>
    %93 = vector.broadcast %83 : vector<8x1xf32> to vector<8x8xf32>
    %94 = arith.mulf %93, %92 : vector<8x8xf32>
    %cst_60 = arith.constant dense<0.000000e+00> : vector<8x8xf32>
    %95 = tpu.matmul %86, %75, %cst_60 {dimension_numbers = #tpu.dot_dimension_numbers<[1], [0], [0], [1], [0, 0, 1, 1], [], []>} : vector<8x8xf32>, vector<8x8xf32>, vector<8x8xf32> -> vector<8x8xf32>
    %96 = arith.addf %94, %95 : vector<8x8xf32>
    %c0_61 = arith.constant 0 : index
    %c16_62 = arith.constant 16 : index
    %97 = vector.load %arg18[%c0_61, %c16_62] : memref<8x32xf32, #tpu.memory_space<vmem>>, vector<8x8xf32>
    tpu.vector_store %arg18[%c0_61, %c16_62], %96 {strides = array<i32>} : memref<8x32xf32, #tpu.memory_space<vmem>>, vector<8x8xf32>,
    %c0_63 = arith.constant 0 : index
    %c2_64 = arith.constant 2 : index
    %98 = vector.load %arg16[%c0_63, %c2_64] : memref<8x4xf32, #tpu.memory_space<vmem>>, vector<8x1xf32>
    tpu.vector_store %arg16[%c0_63, %c2_64], %81 {strides = array<i32>} : memref<8x4xf32, #tpu.memory_space<vmem>>, vector<8x1xf32>,
    %c0_65 = arith.constant 0 : index
    %c24 = arith.constant 24 : index
    %99 = vector.load %arg15[%c0_65, %c24] : memref<8x32xf32, #tpu.memory_space<vmem>>, vector<8x8xf32>
    %100 = vector.extract_strided_slice %13 {offsets = [0, 24], sizes = [8, 8], strides = [1, 1]} : vector<8x32xf32> to vector<8x8xf32>
    %101 = vector.extract_strided_slice %20 {offsets = [0, 24], sizes = [8, 8], strides = [1, 1]} : vector<8x32xf32> to vector<8x8xf32>
    %cst_66 = arith.constant dense<0.000000e+00> : vector<8x8xf32>
    %102 = tpu.matmul %99, %100, %cst_66 {dimension_numbers = #tpu.dot_dimension_numbers<[1], [1], [0], [0], [0, 0, 1, 0], [], []>} : vector<8x8xf32>, vector<8x8xf32>, vector<8x8xf32> -> vector<8x8xf32>
    %c0_67 = arith.constant 0 : index
    %c3 = arith.constant 3 : index
    %103 = vector.load %arg16[%c0_67, %c3] : memref<8x4xf32, #tpu.memory_space<vmem>>, vector<8x1xf32>
    %c0_68 = arith.constant 0 : index
    %c3_69 = arith.constant 3 : index
    %104 = vector.load %arg17[%c0_68, %c3_69] : memref<8x4xf32, #tpu.memory_space<vmem>>, vector<8x1xf32>
    %cst_70 = arith.constant dense<0xFF800000> : vector<8xf32>
    %105 = vector.multi_reduction <maximumf>, %102, %cst_70 [1] : vector<8x8xf32> to vector<8xf32>
    %106 = vector.shape_cast %105 : vector<8xf32> to vector<8x1xf32>
    %107 = arith.maximumf %103, %106 : vector<8x1xf32>
    %108 = arith.subf %103, %107 : vector<8x1xf32>
    %109 = math.exp %108 : vector<8x1xf32>
    %110 = vector.broadcast %107 : vector<8x1xf32> to vector<8x8xf32>
    %111 = arith.subf %102, %110 : vector<8x8xf32>
    %112 = math.exp %111 : vector<8x8xf32>
    %113 = arith.mulf %109, %104 : vector<8x1xf32>
    %cst_71 = arith.constant dense<0.000000e+00> : vector<8xf32>
    %114 = vector.multi_reduction <add>, %112, %cst_71 [1] : vector<8x8xf32> to vector<8xf32>
    %115 = vector.shape_cast %114 : vector<8xf32> to vector<8x1xf32>
    %116 = arith.addf %113, %115 : vector<8x1xf32>
    %c0_72 = arith.constant 0 : index
    %c3_73 = arith.constant 3 : index
    %117 = vector.load %arg17[%c0_72, %c3_73] : memref<8x4xf32, #tpu.memory_space<vmem>>, vector<8x1xf32>
    tpu.vector_store %arg17[%c0_72, %c3_73], %116 {strides = array<i32>} : memref<8x4xf32, #tpu.memory_space<vmem>>, vector<8x1xf32>,
    %c0_74 = arith.constant 0 : index
    %c24_75 = arith.constant 24 : index
    %118 = vector.load %arg18[%c0_74, %c24_75] : memref<8x32xf32, #tpu.memory_space<vmem>>, vector<8x8xf32>
    %119 = vector.broadcast %109 : vector<8x1xf32> to vector<8x8xf32>
    %120 = arith.mulf %119, %118 : vector<8x8xf32>
    %cst_76 = arith.constant dense<0.000000e+00> : vector<8x8xf32>
    %121 = tpu.matmul %112, %101, %cst_76 {dimension_numbers = #tpu.dot_dimension_numbers<[1], [0], [0], [1], [0, 0, 1, 1], [], []>} : vector<8x8xf32>, vector<8x8xf32>, vector<8x8xf32> -> vector<8x8xf32>
    %122 = arith.addf %120, %121 : vector<8x8xf32>
    %c0_77 = arith.constant 0 : index
    %c24_78 = arith.constant 24 : index
    %123 = vector.load %arg18[%c0_77, %c24_78] : memref<8x32xf32, #tpu.memory_space<vmem>>, vector<8x8xf32>
    tpu.vector_store %arg18[%c0_77, %c24_78], %122 {strides = array<i32>} : memref<8x32xf32, #tpu.memory_space<vmem>>, vector<8x8xf32>,
    %c0_79 = arith.constant 0 : index
    %c3_80 = arith.constant 3 : index
    %124 = vector.load %arg16[%c0_79, %c3_80] : memref<8x4xf32, #tpu.memory_space<vmem>>, vector<8x1xf32>
    tpu.vector_store %arg16[%c0_79, %c3_80], %107 {strides = array<i32>} : memref<8x4xf32, #tpu.memory_space<vmem>>, vector<8x1xf32>,
    %c0_i32_81 = arith.constant 0 : i32
    %125 = arith.cmpi eq, %arg2, %c0_i32_81 : i32
    %126 = arith.extui %125 : i1 to i32
    %c0_i32_82 = arith.constant 0 : i32
    %127 = arith.cmpi ne, %126, %c0_i32_82 : i32
    scf.if %127 {
      %c0_83 = arith.constant 0 : index
      %c0_84 = arith.constant 0 : index
      %128 = vector.load %arg17[%c0_83, %c0_84] : memref<8x4xf32, #tpu.memory_space<vmem>>, vector<8x1xf32>
      %129 = tpu.reciprocal %128 : vector<8x1xf32> -> vector<8x1xf32>
      %c0_85 = arith.constant 0 : index
      %c0_86 = arith.constant 0 : index
      %130 = vector.load %arg18[%c0_85, %c0_86] : memref<8x32xf32, #tpu.memory_space<vmem>>, vector<8x8xf32>
      %131 = vector.broadcast %129 : vector<8x1xf32> to vector<8x8xf32>
      %132 = arith.mulf %130, %131 : vector<8x8xf32>
      %c0_87 = arith.constant 0 : index
      %c0_88 = arith.constant 0 : index
      %133 = vector.load %arg18[%c0_87, %c0_88] : memref<8x32xf32, #tpu.memory_space<vmem>>, vector<8x8xf32>
      tpu.vector_store %arg18[%c0_87, %c0_88], %132 {strides = array<i32>} : memref<8x32xf32, #tpu.memory_space<vmem>>, vector<8x8xf32>,
      %c0_89 = arith.constant 0 : index
      %c1_90 = arith.constant 1 : index
      %134 = vector.load %arg17[%c0_89, %c1_90] : memref<8x4xf32, #tpu.memory_space<vmem>>, vector<8x1xf32>
      %135 = tpu.reciprocal %134 : vector<8x1xf32> -> vector<8x1xf32>
      %c0_91 = arith.constant 0 : index
      %c8_92 = arith.constant 8 : index
      %136 = vector.load %arg18[%c0_91, %c8_92] : memref<8x32xf32, #tpu.memory_space<vmem>>, vector<8x8xf32>
      %137 = vector.broadcast %135 : vector<8x1xf32> to vector<8x8xf32>
      %138 = arith.mulf %136, %137 : vector<8x8xf32>
      %c0_93 = arith.constant 0 : index
      %c8_94 = arith.constant 8 : index
      %139 = vector.load %arg18[%c0_93, %c8_94] : memref<8x32xf32, #tpu.memory_space<vmem>>, vector<8x8xf32>
      tpu.vector_store %arg18[%c0_93, %c8_94], %138 {strides = array<i32>} : memref<8x32xf32, #tpu.memory_space<vmem>>, vector<8x8xf32>,
      %c0_95 = arith.constant 0 : index
      %c2_96 = arith.constant 2 : index
      %140 = vector.load %arg17[%c0_95, %c2_96] : memref<8x4xf32, #tpu.memory_space<vmem>>, vector<8x1xf32>
      %141 = tpu.reciprocal %140 : vector<8x1xf32> -> vector<8x1xf32>
      %c0_97 = arith.constant 0 : index
      %c16_98 = arith.constant 16 : index
      %142 = vector.load %arg18[%c0_97, %c16_98] : memref<8x32xf32, #tpu.memory_space<vmem>>, vector<8x8xf32>
      %143 = vector.broadcast %141 : vector<8x1xf32> to vector<8x8xf32>
      %144 = arith.mulf %142, %143 : vector<8x8xf32>
      %c0_99 = arith.constant 0 : index
      %c16_100 = arith.constant 16 : index
      %145 = vector.load %arg18[%c0_99, %c16_100] : memref<8x32xf32, #tpu.memory_space<vmem>>, vector<8x8xf32>
      tpu.vector_store %arg18[%c0_99, %c16_100], %144 {strides = array<i32>} : memref<8x32xf32, #tpu.memory_space<vmem>>, vector<8x8xf32>,
      %c0_101 = arith.constant 0 : index
      %c3_102 = arith.constant 3 : index
      %146 = vector.load %arg17[%c0_101, %c3_102] : memref<8x4xf32, #tpu.memory_space<vmem>>, vector<8x1xf32>
      %147 = tpu.reciprocal %146 : vector<8x1xf32> -> vector<8x1xf32>
      %c0_103 = arith.constant 0 : index
      %c24_104 = arith.constant 24 : index
      %148 = vector.load %arg18[%c0_103, %c24_104] : memref<8x32xf32, #tpu.memory_space<vmem>>, vector<8x8xf32>
      %149 = vector.broadcast %147 : vector<8x1xf32> to vector<8x8xf32>
      %150 = arith.mulf %148, %149 : vector<8x8xf32>
      %c0_105 = arith.constant 0 : index
      %c24_106 = arith.constant 24 : index
      %151 = vector.load %arg18[%c0_105, %c24_106] : memref<8x32xf32, #tpu.memory_space<vmem>>, vector<8x8xf32>
      tpu.vector_store %arg18[%c0_105, %c24_106], %150 {strides = array<i32>} : memref<8x32xf32, #tpu.memory_space<vmem>>, vector<8x8xf32>,
      %c0_107 = arith.constant 0 : index
      %c0_108 = arith.constant 0 : index
      %152 = vector.load %arg18[%c0_107, %c0_108] : memref<8x32xf32, #tpu.memory_space<vmem>>, vector<8x32xf32>
      %c0_109 = arith.constant 0 : index
      %c0_110 = arith.constant 0 : index
      %153 = vector.load %arg12[%c0_109, %c0_110] : memref<32x32xf32, #tpu.memory_space<vmem>>, vector<32x32xf32>
      %cst_111 = arith.constant dense<0.000000e+00> : vector<8x32xf32>
      %154 = tpu.matmul %152, %153, %cst_111 {dimension_numbers = #tpu.dot_dimension_numbers<[1], [0], [0], [1], [0, 0, 1, 1], [], []>} : vector<8x32xf32>, vector<32x32xf32>, vector<8x32xf32> -> vector<8x32xf32>
      %c0_112 = arith.constant 0 : index
      %c0_113 = arith.constant 0 : index
      %155 = vector.load %arg13[%c0_112, %c0_113] : memref<1x32xf32, #tpu.memory_space<vmem>>, vector<1x32xf32>
      %156 = vector.shape_cast %155 : vector<1x32xf32> to vector<32xf32>
      %157 = vector.shape_cast %156 : vector<32xf32> to vector<1x32xf32>
      %158 = vector.broadcast %157 : vector<1x32xf32> to vector<8x32xf32>
      %159 = arith.addf %154, %158 : vector<8x32xf32>
      %c0_114 = arith.constant 0 : index
      %c0_115 = arith.constant 0 : index
      %c0_116 = arith.constant 0 : index
      %160 = vector.load %arg14[%c0_114, %c0_115, %c0_116] : memref<1x8x32xf32, #tpu.memory_space<vmem>>, vector<1x8x32xf32>
      %161 = vector.shape_cast %160 : vector<1x8x32xf32> to vector<8x32xf32>
      %162 = vector.shape_cast %159 : vector<8x32xf32> to vector<1x8x32xf32>
      tpu.vector_store %arg14[%c0_114, %c0_115, %c0_116], %162 {strides = array<i32>} : memref<1x8x32xf32, #tpu.memory_space<vmem>>, vector<1x8x32xf32>,
    } else {
    }
    return
  }
  func.func @transform_0(%arg0: i32, %arg1: i32, %arg2: i32) -> (i32, i32, i32) {
    %c0_i32 = arith.constant 0 : i32
    %c0_i32_0 = arith.constant 0 : i32
    return %arg0, %arg1, %c0_i32 : i32, i32, i32
  }
  func.func @transform_1(%arg0: i32, %arg1: i32, %arg2: i32) -> (i32, i32, i32) {
    %c0_i32 = arith.constant 0 : i32
    %c0_i32_0 = arith.constant 0 : i32
    return %arg0, %arg2, %c0_i32 : i32, i32, i32
  }
  func.func @transform_2(%arg0: i32, %arg1: i32, %arg2: i32) -> (i32, i32, i32) {
    %c0_i32 = arith.constant 0 : i32
    %c0_i32_0 = arith.constant 0 : i32
    return %arg0, %arg2, %c0_i32 : i32, i32, i32
  }
  func.func @transform_3(%arg0: i32, %arg1: i32, %arg2: i32) -> (i32, i32) {
    %c0_i32 = arith.constant 0 : i32
    %c0_i32_0 = arith.constant 0 : i32
    %c0_i32_1 = arith.constant 0 : i32
    return %c0_i32, %c0_i32_0 : i32, i32
  }
  func.func @transform_4(%arg0: i32, %arg1: i32, %arg2: i32) -> (i32, i32) {
    %c0_i32 = arith.constant 0 : i32
    %c0_i32_0 = arith.constant 0 : i32
    %c0_i32_1 = arith.constant 0 : i32
    return %c0_i32, %c0_i32_0 : i32, i32
  }
  func.func @transform_5(%arg0: i32, %arg1: i32, %arg2: i32) -> (i32, i32) {
    %c0_i32 = arith.constant 0 : i32
    %c0_i32_0 = arith.constant 0 : i32
    %c0_i32_1 = arith.constant 0 : i32
    return %c0_i32, %c0_i32_0 : i32, i32
  }
  func.func @transform_6(%arg0: i32, %arg1: i32, %arg2: i32) -> (i32, i32) {
    %c0_i32 = arith.constant 0 : i32
    %c0_i32_0 = arith.constant 0 : i32
    %c0_i32_1 = arith.constant 0 : i32
    return %c0_i32, %c0_i32_0 : i32, i32
  }
  func.func @transform_7(%arg0: i32, %arg1: i32, %arg2: i32) -> (i32, i32) {
    %c0_i32 = arith.constant 0 : i32
    %c0_i32_0 = arith.constant 0 : i32
    %c0_i32_1 = arith.constant 0 : i32
    return %c0_i32, %c0_i32_0 : i32, i32
  }
  func.func @transform_8(%arg0: i32, %arg1: i32, %arg2: i32) -> (i32, i32) {
    %c0_i32 = arith.constant 0 : i32
    %c0_i32_0 = arith.constant 0 : i32
    %c0_i32_1 = arith.constant 0 : i32
    return %c0_i32, %c0_i32_0 : i32, i32
  }
  func.func @transform_9(%arg0: i32, %arg1: i32, %arg2: i32) -> (i32, i32) {
    %c0_i32 = arith.constant 0 : i32
    %c0_i32_0 = arith.constant 0 : i32
    %c0_i32_1 = arith.constant 0 : i32
    return %c0_i32, %c0_i32_0 : i32, i32
  }
  func.func @transform_10(%arg0: i32, %arg1: i32, %arg2: i32) -> (i32, i32) {
    %c0_i32 = arith.constant 0 : i32
    %c0_i32_0 = arith.constant 0 : i32
    %c0_i32_1 = arith.constant 0 : i32
    return %c0_i32, %c0_i32_0 : i32, i32
  }
  func.func @transform_11(%arg0: i32, %arg1: i32, %arg2: i32) -> (i32, i32, i32) {
    %c0_i32 = arith.constant 0 : i32
    %c0_i32_0 = arith.constant 0 : i32
    return %arg0, %arg1, %c0_i32 : i32, i32, i32
  }
}

</mosaic_0001>

<llo_original>
// kernel: tpu_custom_call.1
$region0: #{tpu_custom_call.1}
  #allocation0 [shape = 'u32[]', space=smem, size = 0x4, offset = 0x4, fixed_abs, tag = 'smem constant byte address 0x4 - core index']
  #allocation1 [shape = 'u32[72,128]{1,0:T(1,128)}', space=vmem, size = 0x9000, scoped, tag = 'internal scratch']
  #allocation2 [shape = 'f32[8,32]{1,0:T(8,128)}', space=vmem, size = 0x1000, scoped, tag = 'scratch operand']
  #allocation3 [shape = 'f32[8,4]{1,0:T(8,128)}', space=vmem, size = 0x1000, scoped, tag = 'scratch operand']
  #allocation4 [shape = 'f32[8,4]{1,0:T(8,128)}', space=vmem, size = 0x1000, scoped, tag = 'scratch operand']
  #allocation5 [shape = 'f32[8,32]{1,0:T(8,128)}', space=vmem, size = 0x1000, scoped, tag = 'scratch operand']
  %s0 = inlined_call_operand.hbm [shape: f32[2,8,32], index: 0, kind: input, shape index: {}]
  %s1 = inlined_call_operand.hbm [shape: f32[2,8,32], index: 1, kind: input, shape index: {}]
  %s2 = inlined_call_operand.hbm [shape: f32[2,8,32], index: 2, kind: input, shape index: {}]
  %s3 = inlined_call_operand.hbm [shape: f32[32,32], index: 3, kind: input, shape index: {}]
  %s4 = inlined_call_operand.vmem [shape: f32[1,32], index: 4, kind: input, shape index: {}]
  %s5 = inlined_call_operand.hbm [shape: f32[32,32], index: 5, kind: input, shape index: {}]
  %s6 = inlined_call_operand.vmem [shape: f32[1,32], index: 6, kind: input, shape index: {}]
  %s7 = inlined_call_operand.hbm [shape: f32[32,32], index: 7, kind: input, shape index: {}]
  %s8 = inlined_call_operand.vmem [shape: f32[1,32], index: 8, kind: input, shape index: {}]
  %s9 = inlined_call_operand.hbm [shape: f32[32,32], index: 9, kind: input, shape index: {}]
  %s10 = inlined_call_operand.vmem [shape: f32[1,32], index: 10, kind: input, shape index: {}]
  %s11 = inlined_call_operand.hbm [shape: f32[2,8,32], index: 11, kind: output, shape index: {}]
  %s12 = sld [smem:[#allocation0]]
  $region113: #{tpu_custom_call.1} parent=0
    _
  %s14 = ssub.s32 1, %s12
  %s15 = scalar_select 0, %s14, %s12
  $region1: #{tpu_custom_call.1} parent=0
    #allocation6 [shape = 'u8[8192]{0}', space=vmem, size = 0x2000, scoped, tag = 'input window, operand 0']
    #allocation7 [shape = 's32[2]{0}', space=sflag, size = 0x8, scoped, tag = 'scoped memory for tpu_custom_call.1']
    #allocation8 [shape = 's32[2]{0}', space=sflag, size = 0x8, scoped, tag = 'scoped memory for tpu_custom_call.1']
    #allocation9 [shape = 'u8[8192]{0}', space=vmem, size = 0x2000, scoped, tag = 'input window, operand 1']
    #allocation10 [shape = 's32[2]{0}', space=sflag, size = 0x8, scoped, tag = 'scoped memory for tpu_custom_call.1']
    #allocation11 [shape = 'u8[8192]{0}', space=vmem, size = 0x2000, scoped, tag = 'input window, operand 2']
    #allocation12 [shape = 'u8[16384]{0}', space=vmem, size = 0x4000, scoped, tag = 'input window, operand 3, single buffered']
    #allocation13 [shape = 's32[1]{0}', space=sflag, size = 0x4, scoped, tag = 'scoped memory for tpu_custom_call.1']
    #allocation14 [shape = 'u8[16384]{0}', space=vmem, size = 0x4000, scoped, tag = 'input window, operand 5, single buffered']
    #allocation15 [shape = 'u8[16384]{0}', space=vmem, size = 0x4000, scoped, tag = 'input window, operand 7, single buffered']
    #allocation16 [shape = 's32[1]{0}', space=sflag, size = 0x4, scoped, tag = 'scoped memory for tpu_custom_call.1']
    #allocation17 [shape = 'u8[16384]{0}', space=vmem, size = 0x4000, scoped, tag = 'input window, operand 9, single buffered']
    #allocation18 [shape = 'u8[8192]{0}', space=vmem, size = 0x2000, scoped, tag = 'output window, operand 0']
    %16 = vsyncpa [#allocation7], 0
    %s17 = scalar_lea.sflag [#allocation7], 1
    %18 = vsyncpa %s17, 0
    %19 = vsyncpa [#allocation10], 0
    %s20 = scalar_lea.sflag [#allocation10], 1
    %21 = vsyncpa %s20, 0
    %22 = vsyncpa [#allocation13], 0
    %23 = vsyncpa [#allocation16], 0
    %24 = vsyncpa [#allocation8], 0
    %s25 = scalar_lea.sflag [#allocation8], 1
    %26 = vsyncpa %s25, 0
    loop: start=0, step=1, limit=4
    $region2: #{tpu_custom_call.1} parent=1 // loop_pre_header
      _
    $region3: #{tpu_custom_call.1} parent=1 // loop_header
      %s28 = sphi 0, %s32
      %p29 = scmp.ge.s32.totalorder %s28, 4
      %s35 = sphi 0, %s54
      %s36 = sphi 0, %s50
      %s37 = sphi 0, %s46
      %s38 = sphi 0, %s35
      %s39 = sphi 0, %s36
      %s40 = sphi 0, %s37
      %s41 = sphi 0, %s38
      %s42 = sphi 0, %s39
      %s43 = sphi 0, %s40
      %s59 = sphi 0, %s61
      %s62 = sphi 0, %s59
      %s63 = sphi 0, %s62
      %s79 = sphi 0, %s63
      %s87 = sphi 0, %s89
      %s90 = sphi 0, %s87
      %s91 = sphi 0, %s90
      %s107 = sphi 0, %s91
      %s115 = sphi 0, %s117
      %s118 = sphi 0, %s115
      %s119 = sphi 0, %s118
      %s135 = sphi 0, %s119
      %s139 = sphi 0, %s139
      %s141 = sphi 0, %s139
      %s142 = sphi 0, %s141
      %s156 = sphi 0, %s142
      %s160 = sphi 0, %s160
      %s162 = sphi 0, %s160
      %s163 = sphi 0, %s162
      %s177 = sphi 0, %s163
      %s181 = sphi 0, %s181
      %s183 = sphi 0, %s181
      %s184 = sphi 0, %s183
      %s198 = sphi 0, %s184
      %s202 = sphi 0, %s202
      %s204 = sphi 0, %s202
      %s205 = sphi 0, %s204
      %s219 = sphi 0, %s205
      %s223 = sphi 0, %s223
      %s225 = sphi 0, %s223
      %s226 = sphi 0, %s225
      %s240 = sphi 0, %s226
      %s244 = sphi 0, %s244
      %s246 = sphi 0, %s244
      %s247 = sphi 0, %s246
      %s261 = sphi 0, %s247
      %s265 = sphi 0, %s265
      %s267 = sphi 0, %s265
      %s268 = sphi 0, %s267
      %s282 = sphi 0, %s268
      %s286 = sphi 0, %s286
      %s288 = sphi 0, %s286
      %s289 = sphi 0, %s288
      %s303 = sphi 0, %s289
      %s311 = sphi 0, %s313
      %s314 = sphi 0, %s311
      %s315 = sphi 0, %s314
      %s331 = sphi 0, %s315
    $region4: #{tpu_custom_call.1} parent=1 // loop_header_branch
      %31 = sbr.rel (%p29) target = $region8
    $region5: #{tpu_custom_call.1} parent=1 // loop_body
      %s33 = ssub.s32 %s28, 1
      %s34 = ssub.s32 %s28, 2
      %s44 = sadd.s32 1, %s37
      %p45 = scmp.ge.s32.totalorder %s44, 1
      %s46 = scalar_select %p45, 0, %s44
      %s47 = sadd.s32 1, %s36
      %s48 = scalar_select %p45, %s47, %s36
      %p49 = scmp.ge.s32.totalorder %s48, 1
      %s50 = scalar_select %p49, 0, %s48
      %s51 = sadd.s32 1, %s35
      %s52 = scalar_select %p49, %s51, %s35
      %p53 = scmp.ge.s32.totalorder %s52, 2
      %s54 = scalar_select %p53, 0, %s52
      %s55 = ssub.s32 %s35, %s54
      %s56 = ssub.s32 %s36, %s50
      %s57 = sor.u32 %s55, %s56
      %p58 = scmp.eq.s32.totalorder %s57, 0
      %s60 = sadd.s32 %s59, 1
      %s61 = scalar_select %p58, %s59, %s60
      %p64 = pneg %p58
      %p65 = scmp.eq.s32.totalorder %s28, 1
      %p66 = por %p64, %p65
      %p67 = scmp.ne.s32.totalorder %s59, %s62
      %p68 = scmp.eq.s32.totalorder %s28, 0
      %p69 = por %p67, %p68
      %p70 = scmp.ne.s32.totalorder %s59, %s62
      %p71 = scmp.eq.s32.totalorder %s33, 1
      %p72 = por %p70, %p71
      %p73 = scmp.ne.s32.totalorder %s62, %s63
      %p74 = scmp.eq.s32.totalorder %s33, 0
      %p75 = por %p73, %p74
      %p76 = scmp.ne.s32.totalorder %s62, %s63
      %p77 = scmp.eq.s32.totalorder %s34, 1
      %p78 = por %p76, %p77
      %p80 = scmp.ne.s32.totalorder %s63, %s79
      %p81 = scmp.eq.s32.totalorder %s34, 0
      %p82 = por %p80, %p81
      %s83 = ssub.s32 %s35, %s54
      %s84 = ssub.s32 %s37, %s46
      %s85 = sor.u32 %s83, %s84
      %p86 = scmp.eq.s32.totalorder %s85, 0
      %s88 = sadd.s32 %s87, 1
      %s89 = scalar_select %p86, %s87, %s88
      %p92 = pneg %p86
      %p93 = scmp.eq.s32.totalorder %s28, 1
      %p94 = por %p92, %p93
      %p95 = scmp.ne.s32.totalorder %s87, %s90
      %p96 = scmp.eq.s32.totalorder %s28, 0
      %p97 = por %p95, %p96
      %p98 = scmp.ne.s32.totalorder %s87, %s90
      %p99 = scmp.eq.s32.totalorder %s33, 1
      %p100 = por %p98, %p99
      %p101 = scmp.ne.s32.totalorder %s90, %s91
      %p102 = scmp.eq.s32.totalorder %s33, 0
      %p103 = por %p101, %p102
      %p104 = scmp.ne.s32.totalorder %s90, %s91
      %p105 = scmp.eq.s32.totalorder %s34, 1
      %p106 = por %p104, %p105
      %p108 = scmp.ne.s32.totalorder %s91, %s107
      %p109 = scmp.eq.s32.totalorder %s34, 0
      %p110 = por %p108, %p109
      %s111 = ssub.s32 %s35, %s54
      %s112 = ssub.s32 %s37, %s46
      %s113 = sor.u32 %s111, %s112
      %p114 = scmp.eq.s32.totalorder %s113, 0
      %s116 = sadd.s32 %s115, 1
      %s117 = scalar_select %p114, %s115, %s116
      %p120 = pneg %p114
      %p121 = scmp.eq.s32.totalorder %s28, 1
      %p122 = por %p120, %p121
      %p123 = scmp.ne.s32.totalorder %s115, %s118
      %p124 = scmp.eq.s32.totalorder %s28, 0
      %p125 = por %p123, %p124
      %p126 = scmp.ne.s32.totalorder %s115, %s118
      %p127 = scmp.eq.s32.totalorder %s33, 1
      %p128 = por %p126, %p127
      %p129 = scmp.ne.s32.totalorder %s118, %s119
      %p130 = scmp.eq.s32.totalorder %s33, 0
      %p131 = por %p129, %p130
      %p132 = scmp.ne.s32.totalorder %s118, %s119
      %p133 = scmp.eq.s32.totalorder %s34, 1
      %p134 = por %p132, %p133
      %p136 = scmp.ne.s32.totalorder %s119, %s135
      %p137 = scmp.eq.s32.totalorder %s34, 0
      %p138 = por %p136, %p137
      %s140 = sadd.s32 %s139, 1
      %p143 = scmp.eq.s32.totalorder %s28, 1
      %p144 = scmp.ne.s32.totalorder %s139, %s141
      %p145 = scmp.eq.s32.totalorder %s28, 0
      %p146 = por %p144, %p145
      %p147 = scmp.ne.s32.totalorder %s139, %s141
      %p148 = scmp.eq.s32.totalorder %s33, 1
      %p149 = por %p147, %p148
      %p150 = scmp.ne.s32.totalorder %s141, %s142
      %p151 = scmp.eq.s32.totalorder %s33, 0
      %p152 = por %p150, %p151
      %p153 = scmp.ne.s32.totalorder %s141, %s142
      %p154 = scmp.eq.s32.totalorder %s34, 1
      %p155 = por %p153, %p154
      %p157 = scmp.ne.s32.totalorder %s142, %s156
      %p158 = scmp.eq.s32.totalorder %s34, 0
      %p159 = por %p157, %p158
      %s161 = sadd.s32 %s160, 1
      %p164 = scmp.eq.s32.totalorder %s28, 1
      %p165 = scmp.ne.s32.totalorder %s160, %s162
      %p166 = scmp.eq.s32.totalorder %s28, 0
      %p167 = por %p165, %p166
      %p168 = scmp.ne.s32.totalorder %s160, %s162
      %p169 = scmp.eq.s32.totalorder %s33, 1
      %p170 = por %p168, %p169
      %p171 = scmp.ne.s32.totalorder %s162, %s163
      %p172 = scmp.eq.s32.totalorder %s33, 0
      %p173 = por %p171, %p172
      %p174 = scmp.ne.s32.totalorder %s162, %s163
      %p175 = scmp.eq.s32.totalorder %s34, 1
      %p176 = por %p174, %p175
      %p178 = scmp.ne.s32.totalorder %s163, %s177
      %p179 = scmp.eq.s32.totalorder %s34, 0
      %p180 = por %p178, %p179
      %s182 = sadd.s32 %s181, 1
      %p185 = scmp.eq.s32.totalorder %s28, 1
      %p186 = scmp.ne.s32.totalorder %s181, %s183
      %p187 = scmp.eq.s32.totalorder %s28, 0
      %p188 = por %p186, %p187
      %p189 = scmp.ne.s32.totalorder %s181, %s183
      %p190 = scmp.eq.s32.totalorder %s33, 1
      %p191 = por %p189, %p190
      %p192 = scmp.ne.s32.totalorder %s183, %s184
      %p193 = scmp.eq.s32.totalorder %s33, 0
      %p194 = por %p192, %p193
      %p195 = scmp.ne.s32.totalorder %s183, %s184
      %p196 = scmp.eq.s32.totalorder %s34, 1
      %p197 = por %p195, %p196
      %p199 = scmp.ne.s32.totalorder %s184, %s198
      %p200 = scmp.eq.s32.totalorder %s34, 0
      %p201 = por %p199, %p200
      %s203 = sadd.s32 %s202, 1
      %p206 = scmp.eq.s32.totalorder %s28, 1
      %p207 = scmp.ne.s32.totalorder %s202, %s204
      %p208 = scmp.eq.s32.totalorder %s28, 0
      %p209 = por %p207, %p208
      %p210 = scmp.ne.s32.totalorder %s202, %s204
      %p211 = scmp.eq.s32.totalorder %s33, 1
      %p212 = por %p210, %p211
      %p213 = scmp.ne.s32.totalorder %s204, %s205
      %p214 = scmp.eq.s32.totalorder %s33, 0
      %p215 = por %p213, %p214
      %p216 = scmp.ne.s32.totalorder %s204, %s205
      %p217 = scmp.eq.s32.totalorder %s34, 1
      %p218 = por %p216, %p217
      %p220 = scmp.ne.s32.totalorder %s205, %s219
      %p221 = scmp.eq.s32.totalorder %s34, 0
      %p222 = por %p220, %p221
      %s224 = sadd.s32 %s223, 1
      %p227 = scmp.eq.s32.totalorder %s28, 1
      %p228 = scmp.ne.s32.totalorder %s223, %s225
      %p229 = scmp.eq.s32.totalorder %s28, 0
      %p230 = por %p228, %p229
      %p231 = scmp.ne.s32.totalorder %s223, %s225
      %p232 = scmp.eq.s32.totalorder %s33, 1
      %p233 = por %p231, %p232
      %p234 = scmp.ne.s32.totalorder %s225, %s226
      %p235 = scmp.eq.s32.totalorder %s33, 0
      %p236 = por %p234, %p235
      %p237 = scmp.ne.s32.totalorder %s225, %s226
      %p238 = scmp.eq.s32.totalorder %s34, 1
      %p239 = por %p237, %p238
      %p241 = scmp.ne.s32.totalorder %s226, %s240
      %p242 = scmp.eq.s32.totalorder %s34, 0
      %p243 = por %p241, %p242
      %s245 = sadd.s32 %s244, 1
      %p248 = scmp.eq.s32.totalorder %s28, 1
      %p249 = scmp.ne.s32.totalorder %s244, %s246
      %p250 = scmp.eq.s32.totalorder %s28, 0
      %p251 = por %p249, %p250
      %p252 = scmp.ne.s32.totalorder %s244, %s246
      %p253 = scmp.eq.s32.totalorder %s33, 1
      %p254 = por %p252, %p253
      %p255 = scmp.ne.s32.totalorder %s246, %s247
      %p256 = scmp.eq.s32.totalorder %s33, 0
      %p257 = por %p255, %p256
      %p258 = scmp.ne.s32.totalorder %s246, %s247
      %p259 = scmp.eq.s32.totalorder %s34, 1
      %p260 = por %p258, %p259
      %p262 = scmp.ne.s32.totalorder %s247, %s261
      %p263 = scmp.eq.s32.totalorder %s34, 0
      %p264 = por %p262, %p263
      %s266 = sadd.s32 %s265, 1
      %p269 = scmp.eq.s32.totalorder %s28, 1
      %p270 = scmp.ne.s32.totalorder %s265, %s267
      %p271 = scmp.eq.s32.totalorder %s28, 0
      %p272 = por %p270, %p271
      %p273 = scmp.ne.s32.totalorder %s265, %s267
      %p274 = scmp.eq.s32.totalorder %s33, 1
      %p275 = por %p273, %p274
      %p276 = scmp.ne.s32.totalorder %s267, %s268
      %p277 = scmp.eq.s32.totalorder %s33, 0
      %p278 = por %p276, %p277
      %p279 = scmp.ne.s32.totalorder %s267, %s268
      %p280 = scmp.eq.s32.totalorder %s34, 1
      %p281 = por %p279, %p280
      %p283 = scmp.ne.s32.totalorder %s268, %s282
      %p284 = scmp.eq.s32.totalorder %s34, 0
      %p285 = por %p283, %p284
      %s287 = sadd.s32 %s286, 1
      %p290 = scmp.eq.s32.totalorder %s28, 1
      %p291 = scmp.ne.s32.totalorder %s286, %s288
      %p292 = scmp.eq.s32.totalorder %s28, 0
      %p293 = por %p291, %p292
      %p294 = scmp.ne.s32.totalorder %s286, %s288
      %p295 = scmp.eq.s32.totalorder %s33, 1
      %p296 = por %p294, %p295
      %p297 = scmp.ne.s32.totalorder %s288, %s289
      %p298 = scmp.eq.s32.totalorder %s33, 0
      %p299 = por %p297, %p298
      %p300 = scmp.ne.s32.totalorder %s288, %s289
      %p301 = scmp.eq.s32.totalorder %s34, 1
      %p302 = por %p300, %p301
      %p304 = scmp.ne.s32.totalorder %s289, %s303
      %p305 = scmp.eq.s32.totalorder %s34, 0
      %p306 = por %p304, %p305
      %s307 = ssub.s32 %s35, %s54
      %s308 = ssub.s32 %s36, %s50
      %s309 = sor.u32 %s307, %s308
      %p310 = scmp.eq.s32.totalorder %s309, 0
      %s312 = sadd.s32 %s311, 1
      %s313 = scalar_select %p310, %s311, %s312
      %p316 = pneg %p310
      %p317 = scmp.eq.s32.totalorder %s28, 1
      %p318 = por %p316, %p317
      %p319 = scmp.ne.s32.totalorder %s311, %s314
      %p320 = scmp.eq.s32.totalorder %s28, 0
      %p321 = por %p319, %p320
      %p322 = scmp.ne.s32.totalorder %s311, %s314
      %p323 = scmp.eq.s32.totalorder %s33, 1
      %p324 = por %p322, %p323
      %p325 = scmp.ne.s32.totalorder %s314, %s315
      %p326 = scmp.eq.s32.totalorder %s33, 0
      %p327 = por %p325, %p326
      %p328 = scmp.ne.s32.totalorder %s314, %s315
      %p329 = scmp.eq.s32.totalorder %s34, 1
      %p330 = por %p328, %p329
      %p332 = scmp.ne.s32.totalorder %s315, %s331
      %p333 = scmp.eq.s32.totalorder %s34, 0
      %p334 = por %p332, %p333
      %p335 = scmp.le.s32.totalorder 1, %s28
      %p336 = scmp.lt.s32.totalorder %s28, 3
      %p337 = pnand %p335, %p336
      %p338 = pneg %p337
      // Predicated region
      $region9: #{tpu_custom_call.1} parent=5 // pred_check
        _
      $region10: #{tpu_custom_call.1} parent=5 // pred_check_branch
        %340 = sbr.rel (%p337) target = $region12
      $region11: #{tpu_custom_call.1} parent=5 // pred_region
        %s341 = ssub.s32 %s28, 1
        // Predicated region
        $region13: #{tpu_custom_call.1} parent=11 // pred_check
          %p342 = pneg %p152
        $region14: #{tpu_custom_call.1} parent=11 // pred_check_branch
          %344 = sbr.rel (%p342) target = $region16
        $region15: #{tpu_custom_call.1} parent=11 // pred_region
          %346 = vsyncadd [#allocation13], 0
          %s347 = sshll.u32 %s3, 4
          %s348 = int_to_ptr.hbm [resolvable:$true] %s347
          %s349 = sshll.u32 [#allocation12], 4
          %s350 = int_to_ptr.vmem [resolvable:$true] %s349
          %355 = dma.hbm_to_vmem [thread:$0]  %s348, 512, %s350, [#allocation13], 128, 128, 8
        $region16: #{tpu_custom_call.1} parent=11 // pred_fallthru
          _
        // Predicated region
        $region17: #{tpu_custom_call.1} parent=11 // pred_check
          %p356 = pneg %p173
        $region18: #{tpu_custom_call.1} parent=11 // pred_check_branch
          %358 = sbr.rel (%p356) target = $region20
        $region19: #{tpu_custom_call.1} parent=11 // pred_region
          _
        $region20: #{tpu_custom_call.1} parent=11 // pred_fallthru
          _
        // Predicated region
        $region21: #{tpu_custom_call.1} parent=11 // pred_check
          %p359 = pneg %p194
        $region22: #{tpu_custom_call.1} parent=11 // pred_check_branch
          %361 = sbr.rel (%p359) target = $region24
        $region23: #{tpu_custom_call.1} parent=11 // pred_region
          %363 = vsyncadd [#allocation13], 0
          %s364 = sshll.u32 %s5, 4
          %s365 = int_to_ptr.hbm [resolvable:$true] %s364
          %s366 = sshll.u32 [#allocation14], 4
          %s367 = int_to_ptr.vmem [resolvable:$true] %s366
          %372 = dma.hbm_to_vmem [thread:$0]  %s365, 512, %s367, [#allocation13], 128, 128, 8
        $region24: #{tpu_custom_call.1} parent=11 // pred_fallthru
          _
        // Predicated region
        $region25: #{tpu_custom_call.1} parent=11 // pred_check
          %p373 = pneg %p215
        $region26: #{tpu_custom_call.1} parent=11 // pred_check_branch
          %375 = sbr.rel (%p373) target = $region28
        $region27: #{tpu_custom_call.1} parent=11 // pred_region
          _
        $region28: #{tpu_custom_call.1} parent=11 // pred_fallthru
          _
        // Predicated region
        $region29: #{tpu_custom_call.1} parent=11 // pred_check
          %p376 = pneg %p236
        $region30: #{tpu_custom_call.1} parent=11 // pred_check_branch
          %378 = sbr.rel (%p376) target = $region32
        $region31: #{tpu_custom_call.1} parent=11 // pred_region
          %380 = vsyncadd [#allocation16], 0
          %s381 = sshll.u32 %s7, 4
          %s382 = int_to_ptr.hbm [resolvable:$true] %s381
          %s383 = sshll.u32 [#allocation15], 4
          %s384 = int_to_ptr.vmem [resolvable:$true] %s383
          %389 = dma.hbm_to_vmem [thread:$0]  %s382, 512, %s384, [#allocation16], 128, 128, 8
        $region32: #{tpu_custom_call.1} parent=11 // pred_fallthru
          _
        // Predicated region
        $region33: #{tpu_custom_call.1} parent=11 // pred_check
          %p390 = pneg %p257
        $region34: #{tpu_custom_call.1} parent=11 // pred_check_branch
          %392 = sbr.rel (%p390) target = $region36
        $region35: #{tpu_custom_call.1} parent=11 // pred_region
          _
        $region36: #{tpu_custom_call.1} parent=11 // pred_fallthru
          _
        // Predicated region
        $region37: #{tpu_custom_call.1} parent=11 // pred_check
          %p393 = pneg %p278
        $region38: #{tpu_custom_call.1} parent=11 // pred_check_branch
          %395 = sbr.rel (%p393) target = $region40
        $region39: #{tpu_custom_call.1} parent=11 // pred_region
          %397 = vsyncadd [#allocation16], 0
          %s398 = sshll.u32 %s9, 4
          %s399 = int_to_ptr.hbm [resolvable:$true] %s398
          %s400 = sshll.u32 [#allocation17], 4
          %s401 = int_to_ptr.vmem [resolvable:$true] %s400
          %406 = dma.hbm_to_vmem [thread:$0]  %s399, 512, %s401, [#allocation16], 128, 128, 8
        $region40: #{tpu_custom_call.1} parent=11 // pred_fallthru
          _
        // Predicated region
        $region41: #{tpu_custom_call.1} parent=11 // pred_check
          %p407 = pneg %p299
        $region42: #{tpu_custom_call.1} parent=11 // pred_check_branch
          %409 = sbr.rel (%p407) target = $region44
        $region43: #{tpu_custom_call.1} parent=11 // pred_region
          _
        $region44: #{tpu_custom_call.1} parent=11 // pred_fallthru
          _
      $region12: #{tpu_custom_call.1} parent=5 // pred_fallthru
        _
      %p410 = scmp.lt.s32.totalorder %s28, 2
      // Predicated region
      $region45: #{tpu_custom_call.1} parent=5 // pred_check
        %p411 = pneg %p410
      $region46: #{tpu_custom_call.1} parent=5 // pred_check_branch
        %413 = sbr.rel (%p411) target = $region48
      $region47: #{tpu_custom_call.1} parent=5 // pred_region
        // Predicated region
        $region49: #{tpu_custom_call.1} parent=47 // pred_check
          %p414 = pneg %p69
        $region50: #{tpu_custom_call.1} parent=47 // pred_check_branch
          %416 = sbr.rel (%p414) target = $region52
        $region51: #{tpu_custom_call.1} parent=47 // pred_region
          %s417 = sand.u32 %s59, 1
          %s418 = scalar_lea.sflag [#allocation7], %s417
          %s419 = sand.u32 %s59, 1
          %s420 = smul.addr %s419, 8
          %s421 = scalar_lea.vmem [#allocation6], %s420
          %423 = vsyncadd %s418, 0
          %s424 = sadd.s32 %s36, %s35
          %s425 = smul.addr %s424, 8
          %s426 = scalar_lea.hbm %s0, %s425
          %s428 = sshll.u32 %s426, 4
          %s429 = int_to_ptr.hbm [resolvable:$true] %s428
          %s430 = sshll.u32 %s421, 4
          %s431 = int_to_ptr.vmem [resolvable:$true] %s430
          %433 = dma.hbm_to_vmem [thread:$0]  %s429, 128, %s431, %s418
        $region52: #{tpu_custom_call.1} parent=47 // pred_fallthru
          _
        // Predicated region
        $region53: #{tpu_custom_call.1} parent=47 // pred_check
          %p434 = pneg %p97
        $region54: #{tpu_custom_call.1} parent=47 // pred_check_branch
          %436 = sbr.rel (%p434) target = $region56
        $region55: #{tpu_custom_call.1} parent=47 // pred_region
          %s437 = sand.u32 %s28, 1
          %s438 = scalar_lea.sflag [#allocation10], %s437
          %s439 = sand.u32 %s87, 1
          %s440 = smul.addr %s439, 8
          %s441 = scalar_lea.vmem [#allocation9], %s440
          %443 = vsyncadd %s438, 0
          %s444 = sadd.s32 %s37, %s35
          %s445 = smul.addr %s444, 8
          %s446 = scalar_lea.hbm %s1, %s445
          %s448 = sshll.u32 %s446, 4
          %s449 = int_to_ptr.hbm [resolvable:$true] %s448
          %s450 = sshll.u32 %s441, 4
          %s451 = int_to_ptr.vmem [resolvable:$true] %s450
          %453 = dma.hbm_to_vmem [thread:$0]  %s449, 128, %s451, %s438
        $region56: #{tpu_custom_call.1} parent=47 // pred_fallthru
          _
        // Predicated region
        $region57: #{tpu_custom_call.1} parent=47 // pred_check
          %p454 = pneg %p125
        $region58: #{tpu_custom_call.1} parent=47 // pred_check_branch
          %456 = sbr.rel (%p454) target = $region60
        $region59: #{tpu_custom_call.1} parent=47 // pred_region
          %s457 = sand.u32 %s28, 1
          %s458 = scalar_lea.sflag [#allocation10], %s457
          %s459 = sand.u32 %s115, 1
          %s460 = smul.addr %s459, 8
          %s461 = scalar_lea.vmem [#allocation11], %s460
          %463 = vsyncadd %s458, 0
          %s464 = sadd.s32 %s37, %s35
          %s465 = smul.addr %s464, 8
          %s466 = scalar_lea.hbm %s2, %s465
          %s468 = sshll.u32 %s466, 4
          %s469 = int_to_ptr.hbm [resolvable:$true] %s468
          %s470 = sshll.u32 %s461, 4
          %s471 = int_to_ptr.vmem [resolvable:$true] %s470
          %473 = dma.hbm_to_vmem [thread:$0]  %s469, 128, %s471, %s458
        $region60: #{tpu_custom_call.1} parent=47 // pred_fallthru
          _
      $region48: #{tpu_custom_call.1} parent=5 // pred_fallthru
        _
      %p474 = scmp.le.s32.totalorder 1, %s28
      %p475 = scmp.lt.s32.totalorder %s28, 3
      %p476 = pnand %p474, %p475
      %p477 = pneg %p476
      // Predicated region
      $region61: #{tpu_custom_call.1} parent=5 // pred_check
        _
      $region62: #{tpu_custom_call.1} parent=5 // pred_check_branch
        %479 = sbr.rel (%p476) target = $region64
      $region63: #{tpu_custom_call.1} parent=5 // pred_region
        %s480 = ssub.s32 %s28, 1
        %s481 = sand.u32 %s62, 1
        %s482 = scalar_lea.sflag [#allocation7], %s481
        %s483 = sand.u32 %s62, 1
        %s484 = smul.addr %s483, 8
        %s485 = scalar_lea.vmem [#allocation6], %s484
        // Predicated region
        $region65: #{tpu_custom_call.1} parent=63 // pred_check
          %p486 = pneg %p75
        $region66: #{tpu_custom_call.1} parent=63 // pred_check_branch
          %488 = sbr.rel (%p486) target = $region68
        $region67: #{tpu_custom_call.1} parent=63 // pred_region
          %490 = dma.done %s482, 128
        $region68: #{tpu_custom_call.1} parent=63 // pred_fallthru
          _
        %s491 = sand.u32 %s33, 1
        %s492 = scalar_lea.sflag [#allocation10], %s491
        %s493 = sand.u32 %s90, 1
        %s494 = smul.addr %s493, 8
        %s495 = scalar_lea.vmem [#allocation9], %s494
        // Predicated region
        $region69: #{tpu_custom_call.1} parent=63 // pred_check
          %p496 = pneg %p103
        $region70: #{tpu_custom_call.1} parent=63 // pred_check_branch
          %498 = sbr.rel (%p496) target = $region72
        $region71: #{tpu_custom_call.1} parent=63 // pred_region
          %500 = dma.done %s492, 128
        $region72: #{tpu_custom_call.1} parent=63 // pred_fallthru
          _
        %s501 = sand.u32 %s33, 1
        %s502 = scalar_lea.sflag [#allocation10], %s501
        %s503 = sand.u32 %s118, 1
        %s504 = smul.addr %s503, 8
        %s505 = scalar_lea.vmem [#allocation11], %s504
        // Predicated region
        $region73: #{tpu_custom_call.1} parent=63 // pred_check
          %p506 = pneg %p131
        $region74: #{tpu_custom_call.1} parent=63 // pred_check_branch
          %508 = sbr.rel (%p506) target = $region76
        $region75: #{tpu_custom_call.1} parent=63 // pred_region
          %510 = dma.done %s502, 128
        $region76: #{tpu_custom_call.1} parent=63 // pred_fallthru
          _
        // Predicated region
        $region77: #{tpu_custom_call.1} parent=63 // pred_check
          %p511 = pneg %p152
        $region78: #{tpu_custom_call.1} parent=63 // pred_check_branch
          %513 = sbr.rel (%p511) target = $region80
        $region79: #{tpu_custom_call.1} parent=63 // pred_region
          %515 = dma.done [#allocation13], 512
        $region80: #{tpu_custom_call.1} parent=63 // pred_fallthru
          _
        // Predicated region
        $region81: #{tpu_custom_call.1} parent=63 // pred_check
          %p516 = pneg %p194
        $region82: #{tpu_custom_call.1} parent=63 // pred_check_branch
          %518 = sbr.rel (%p516) target = $region84
        $region83: #{tpu_custom_call.1} parent=63 // pred_region
          %520 = dma.done [#allocation13], 512
        $region84: #{tpu_custom_call.1} parent=63 // pred_fallthru
          _
        // Predicated region
        $region85: #{tpu_custom_call.1} parent=63 // pred_check
          %p521 = pneg %p236
        $region86: #{tpu_custom_call.1} parent=63 // pred_check_branch
          %523 = sbr.rel (%p521) target = $region88
        $region87: #{tpu_custom_call.1} parent=63 // pred_region
          %525 = dma.done [#allocation16], 512
        $region88: #{tpu_custom_call.1} parent=63 // pred_fallthru
          _
        // Predicated region
        $region89: #{tpu_custom_call.1} parent=63 // pred_check
          %p526 = pneg %p278
        $region90: #{tpu_custom_call.1} parent=63 // pred_check_branch
          %528 = sbr.rel (%p526) target = $region92
        $region91: #{tpu_custom_call.1} parent=63 // pred_region
          %530 = dma.done [#allocation16], 512
        $region92: #{tpu_custom_call.1} parent=63 // pred_fallthru
          _
        %s531 = sand.u32 %s62, 1
        %s532 = scalar_lea.sflag [#allocation7], %s531
        %s533 = sand.u32 %s62, 1
        %s534 = smul.addr %s533, 8
        %s535 = scalar_lea.vmem [#allocation6], %s534
        %p536 = pneg %p75
        %p537 = pneg %p72
        %s538 = sand.u32 %s33, 1
        %s539 = scalar_lea.sflag [#allocation10], %s538
        %s540 = sand.u32 %s90, 1
        %s541 = smul.addr %s540, 8
        %s542 = scalar_lea.vmem [#allocation9], %s541
        %p543 = pneg %p103
        %p544 = pneg %p100
        %s545 = sand.u32 %s33, 1
        %s546 = scalar_lea.sflag [#allocation10], %s545
        %s547 = sand.u32 %s118, 1
        %s548 = smul.addr %s547, 8
        %s549 = scalar_lea.vmem [#allocation11], %s548
        %p550 = pneg %p131
        %p551 = pneg %p128
        %p552 = pneg %p152
        %p553 = pneg %p149
        %p554 = pneg %p173
        %p555 = pneg %p170
        %p556 = pneg %p194
        %p557 = pneg %p191
        %p558 = pneg %p215
        %p559 = pneg %p212
        %p560 = pneg %p236
        %p561 = pneg %p233
        %p562 = pneg %p257
        %p563 = pneg %p254
        %p564 = pneg %p278
        %p565 = pneg %p275
        %p566 = pneg %p299
        %p567 = pneg %p296
        %p568 = pneg %p327
        %p569 = pneg %p324
        %s570 = sand.u32 %s314, 1
        %s571 = scalar_lea.sflag [#allocation8], %s570
        %s572 = sand.u32 %s314, 1
        %s573 = smul.addr %s572, 8
        %s574 = scalar_lea.vmem [#allocation18], %s573
        %p575 = scmp.eq.s32.totalorder %s40, 0
        // Predicated region
        $region93: #{tpu_custom_call.1} parent=63 // pred_check
          %p576 = pneg %p575
        $region94: #{tpu_custom_call.1} parent=63 // pred_check_branch
          %578 = sbr.rel (%p576) target = $region96
        $region95: #{tpu_custom_call.1} parent=63 // pred_region
          %v579 = vld [vmem:[%s485] sm:$0xff]
          %v580 = vld [vmem:[#allocation12] sm:$0xff]
          %v581 = vld [vmem:[#allocation12 + $0x8] sm:$0xff]
          %v582 = vld [vmem:[#allocation12 + $0x10] sm:$0xff]
          %v583 = vld [vmem:[#allocation12 + $0x18] sm:$0xff]
          %v584 = vld [vmem:[%s4] sm:$0x1]
          %v586 = vperm.slane %v584, 0
          %vm588 = vcmask 261120
          %v590 = vsel %vm588, %v579, 0
          %592 = vmatpush.msra.mxu0 0.0
          %593 = vmatpush.msra.mxu0 0.0
          %594 = vmatpush.msra.mxu0 0.0
          %595 = vmatpush.msra.mxu0 0.0
          %596 = vmatpush.msra.mxu0 0.0
          %597 = vmatpush.msra.mxu0 0.0
          %598 = vmatpush.msra.mxu0 0.0
          %599 = vmatpush.msra.mxu0 0.0
          %600 = vmatpush.msra.mxu0 0.0
          %601 = vmatpush.msra.mxu0 0.0
          %602 = vmatpush.msra.mxu0 0.0
          %603 = vmatpush.msra.mxu0 0.0
          %604 = vmatpush.msra.mxu0 %v583
          %605 = vmatpush.msra.mxu0 %v582
          %606 = vmatpush.msra.mxu0 %v581
          %607 = vmatpush.msra.mxu0 %v580
          %608 = vmatmul.f32.gmra.mxu0 %v590
          %v609 = vpop.f32.mrf.mxu0
          %v610 = vadd.f32 %v586, %v609
          %611 = vdwg.mxu0
          %612 = vst.msk [vmem:[#allocation2] sm:$0xff] %vm588, %v610
          %vm613 = vcmask 31744
          %614 = vst.msk [vmem:[#allocation3] sm:$0xff] %vm613, -inf
          %615 = vst.msk [vmem:[#allocation4] sm:$0xff] %vm613, 0.0
          %616 = vst.msk [vmem:[#allocation5] sm:$0xff] %vm588, 0.0
        $region96: #{tpu_custom_call.1} parent=63 // pred_fallthru
          _
        %v617 = vld [vmem:[%s495] sm:$0xff]
        %v618 = vld [vmem:[%s505] sm:$0xff]
        %v619 = vld [vmem:[#allocation14] sm:$0xff]
        %v620 = vld [vmem:[#allocation14 + $0x8] sm:$0xff]
        %v621 = vld [vmem:[#allocation14 + $0x10] sm:$0xff]
        %v622 = vld [vmem:[#allocation14 + $0x18] sm:$0xff]
        %v623 = vld [vmem:[%s6] sm:$0x1]
        %v625 = vperm.slane %v623, 0
        %vm627 = vcmask 261120
        %v629 = vsel %vm627, %v617, 0
        %631 = vmatpush.msra.mxu0 0.0
        %632 = vmatpush.msra.mxu0 0.0
        %633 = vmatpush.msra.mxu0 0.0
        %634 = vmatpush.msra.mxu0 0.0
        %635 = vmatpush.msra.mxu0 0.0
        %636 = vmatpush.msra.mxu0 0.0
        %637 = vmatpush.msra.mxu0 0.0
        %638 = vmatpush.msra.mxu0 0.0
        %639 = vmatpush.msra.mxu0 0.0
        %640 = vmatpush.msra.mxu0 0.0
        %641 = vmatpush.msra.mxu0 0.0
        %642 = vmatpush.msra.mxu0 0.0
        %643 = vmatpush.msra.mxu0 %v622
        %644 = vmatpush.msra.mxu0 %v621
        %645 = vmatpush.msra.mxu0 %v620
        %646 = vmatpush.msra.mxu0 %v619
        %647 = vmatmul.f32.gmra.mxu0 %v629
        %v648 = vpop.f32.mrf.mxu0
        %v649 = vadd.f32 %v625, %v648
        %650 = vdwg.mxu0
        %v651 = vld [vmem:[#allocation15] sm:$0xff]
        %v652 = vld [vmem:[#allocation15 + $0x8] sm:$0xff]
        %v653 = vld [vmem:[#allocation15 + $0x10] sm:$0xff]
        %v654 = vld [vmem:[#allocation15 + $0x18] sm:$0xff]
        %v655 = vld [vmem:[%s8] sm:$0x1]
        %v657 = vperm.slane %v655, 0
        %v660 = vsel %vm627, %v618, 0
        %662 = vmatpush.msra.mxu0 0.0
        %663 = vmatpush.msra.mxu0 0.0
        %664 = vmatpush.msra.mxu0 0.0
        %665 = vmatpush.msra.mxu0 0.0
        %666 = vmatpush.msra.mxu0 0.0
        %667 = vmatpush.msra.mxu0 0.0
        %668 = vmatpush.msra.mxu0 0.0
        %669 = vmatpush.msra.mxu0 0.0
        %670 = vmatpush.msra.mxu0 0.0
        %671 = vmatpush.msra.mxu0 0.0
        %672 = vmatpush.msra.mxu0 0.0
        %673 = vmatpush.msra.mxu0 0.0
        %674 = vmatpush.msra.mxu0 %v654
        %675 = vmatpush.msra.mxu0 %v653
        %676 = vmatpush.msra.mxu0 %v652
        %677 = vmatpush.msra.mxu0 %v651
        %678 = vmatmul.f32.gmra.mxu0 %v660
        %v679 = vpop.f32.mrf.mxu0
        %v680 = vadd.f32 %v657, %v679
        %681 = vdwg.mxu0
        %v682 = vld [vmem:[#allocation2] sm:$0xff]
        %vm683 = vcmask 64512
        %v685 = vsel %vm683, %v682, 0
        %v688 = vsel %vm683, %v649, 0
        %690 = vmatpush.xpose.msra.mxu0 0.0
        %691 = vmatpush.xpose.msra.mxu0 0.0
        %692 = vmatpush.xpose.msra.mxu0 0.0
        %693 = vmatpush.xpose.msra.mxu0 0.0
        %694 = vmatpush.xpose.msra.mxu0 0.0
        %695 = vmatpush.xpose.msra.mxu0 0.0
        %696 = vmatpush.xpose.msra.mxu0 0.0
        %697 = vmatpush.xpose.msra.mxu0 0.0
        %698 = vmatpush.xpose.msra.mxu0 0.0
        %699 = vmatpush.xpose.msra.mxu0 0.0
        %700 = vmatpush.xpose.msra.mxu0 0.0
        %701 = vmatpush.xpose.msra.mxu0 0.0
        %702 = vmatpush.xpose.msra.mxu0 0.0
        %703 = vmatpush.xpose.msra.mxu0 0.0
        %704 = vmatpush.xpose.msra.mxu0 0.0
        %705 = vmatpush.xpose.msra.mxu0 %v688
        %706 = vmatmul.f32.gmra.mxu0 %v685
        %v707 = vpop.f32.mrf.mxu0
        %v708 = vadd.f32 0.0, %v707
        %709 = vdwg.mxu0
        %v710 = vld [vmem:[#allocation3] sm:$0xff]
        %v711 = vld [vmem:[#allocation4] sm:$0xff]
        %v712 = vsel %vm683, %v708, -inf
        %713 = vmax.xlane.f32.xlu0 %v712
        %v714 = vpop.xlane.xlu0 %713
        %v715 = vmax.f32 %v710, %v714
        %v716 = vsub.f32 %v710, %v715
        %v717 = vmul.f32 %v716, 1.442695
        %v718 = vpow.pop %v717
        %720 = vset.pattern.permute.xlu0 0
        %721 = vperm.xlu0 %720, %v715
        %v722 = vpop.permute.xlu0 %721
        %v724 = vsub.f32 %v708, %v722
        %v725 = vmul.f32 %v724, 1.442695
        %v726 = vpow.pop %v725
        %v727 = vmul.f32 %v718, %v711
        %v728 = vsel %vm683, %v726, 0.0
        %729 = vadd.xlane.f32.xlu0 %v728
        %v730 = vpop.xlane.xlu0 %729
        %v731 = vadd.f32 %v727, %v730
        %vm732 = vcmask 7168
        %733 = vst.msk [vmem:[#allocation4] sm:$0xff] %vm732, %v731
        %v734 = vld [vmem:[#allocation5] sm:$0xff]
        %736 = vset.pattern.permute.xlu0 0
        %737 = vperm.xlu0 %736, %v718
        %v738 = vpop.permute.xlu0 %737
        %v740 = vmul.f32 %v738, %v734
        %v742 = vsel %vm683, %v726, 0
        %744 = vmatpush.msra.mxu0 0.0
        %745 = vmatpush.msra.mxu0 0.0
        %746 = vmatpush.msra.mxu0 0.0
        %747 = vmatpush.msra.mxu0 0.0
        %748 = vmatpush.msra.mxu0 0.0
        %749 = vmatpush.msra.mxu0 0.0
        %750 = vmatpush.msra.mxu0 0.0
        %751 = vmatpush.msra.mxu0 0.0
        %752 = vmatpush.msra.mxu0 0.0
        %753 = vmatpush.msra.mxu0 0.0
        %754 = vmatpush.msra.mxu0 0.0
        %755 = vmatpush.msra.mxu0 0.0
        %756 = vmatpush.msra.mxu0 0.0
        %757 = vmatpush.msra.mxu0 0.0
        %758 = vmatpush.msra.mxu0 0.0
        %759 = vmatpush.msra.mxu0 %v680
        %760 = vmatmul.f32.gmra.mxu0 %v742
        %v761 = vpop.f32.mrf.mxu0
        %v762 = vadd.f32 0.0, %v761
        %763 = vdwg.mxu0
        %v764 = vadd.f32 %v740, %v762
        %765 = vst.msk [vmem:[#allocation5] sm:$0xff] %vm683, %v764
        %766 = vst.msk [vmem:[#allocation3] sm:$0xff] %vm732, %v715
        %v767 = vld [vmem:[#allocation2] sm:$0xff]
        %769 = vrot.lane.b32.xlu0 %v767, 120
        %v770 = vpop.permute.xlu0 %769
        %771 = vrot.lane.b32.xlu0 %v649, 120
        %v772 = vpop.permute.xlu0 %771
        %v773 = vsel %vm683, %v770, 0
        %v775 = vsel %vm683, %v772, 0
        %777 = vmatpush.xpose.msra.mxu0 0.0
        %778 = vmatpush.xpose.msra.mxu0 0.0
        %779 = vmatpush.xpose.msra.mxu0 0.0
        %780 = vmatpush.xpose.msra.mxu0 0.0
        %781 = vmatpush.xpose.msra.mxu0 0.0
        %782 = vmatpush.xpose.msra.mxu0 0.0
        %783 = vmatpush.xpose.msra.mxu0 0.0
        %784 = vmatpush.xpose.msra.mxu0 0.0
        %785 = vmatpush.xpose.msra.mxu0 0.0
        %786 = vmatpush.xpose.msra.mxu0 0.0
        %787 = vmatpush.xpose.msra.mxu0 0.0
        %788 = vmatpush.xpose.msra.mxu0 0.0
        %789 = vmatpush.xpose.msra.mxu0 0.0
        %790 = vmatpush.xpose.msra.mxu0 0.0
        %791 = vmatpush.xpose.msra.mxu0 0.0
        %792 = vmatpush.xpose.msra.mxu0 %v775
        %793 = vmatmul.f32.gmra.mxu0 %v773
        %v794 = vpop.f32.mrf.mxu0
        %v795 = vadd.f32 0.0, %v794
        %796 = vdwg.mxu0
        %v797 = vld [vmem:[#allocation3] sm:$0xff]
        %v798 = vld [vmem:[#allocation4] sm:$0xff]
        %v799 = vsel %vm683, %v795, -inf
        %800 = vmax.xlane.f32.xlu0 %v799
        %v801 = vpop.xlane.xlu0 %800
        %v802 = vmax.f32 %v797, %v801
        %v803 = vsub.f32 %v797, %v802
        %v804 = vmul.f32 %v803, 1.442695
        %v805 = vpow.pop %v804
        %807 = vset.pattern.permute.xlu0 1
        %808 = vperm.xlu0 %807, %v802
        %v809 = vpop.permute.xlu0 %808
        %v811 = vsub.f32 %v795, %v809
        %v812 = vmul.f32 %v811, 1.442695
        %v813 = vpow.pop %v812
        %v814 = vmul.f32 %v805, %v798
        %v815 = vsel %vm683, %v813, 0.0
        %816 = vadd.xlane.f32.xlu0 %v815
        %v817 = vpop.xlane.xlu0 %816
        %v818 = vadd.f32 %v814, %v817
        %vm819 = vcmask 15368
        %820 = vst.msk [vmem:[#allocation4] sm:$0xff] %vm819, %v818
        %v821 = vld [vmem:[#allocation5] sm:$0xff]
        %823 = vset.pattern.permute.xlu0 1
        %824 = vperm.xlu0 %823, %v805
        %v825 = vpop.permute.xlu0 %824
        %v827 = vmul.f32 %v825, %v821
        %829 = vrot.lane.b32.xlu0 %v680, 120
        %v830 = vpop.permute.xlu0 %829
        %v833 = vsel %vm683, %v813, 0
        %835 = vmatpush.msra.mxu0 0.0
        %836 = vmatpush.msra.mxu0 0.0
        %837 = vmatpush.msra.mxu0 0.0
        %838 = vmatpush.msra.mxu0 0.0
        %839 = vmatpush.msra.mxu0 0.0
        %840 = vmatpush.msra.mxu0 0.0
        %841 = vmatpush.msra.mxu0 0.0
        %842 = vmatpush.msra.mxu0 0.0
        %843 = vmatpush.msra.mxu0 0.0
        %844 = vmatpush.msra.mxu0 0.0
        %845 = vmatpush.msra.mxu0 0.0
        %846 = vmatpush.msra.mxu0 0.0
        %847 = vmatpush.msra.mxu0 0.0
        %848 = vmatpush.msra.mxu0 0.0
        %849 = vmatpush.msra.mxu0 0.0
        %850 = vmatpush.msra.mxu0 %v830
        %851 = vmatmul.f32.gmra.mxu0 %v833
        %v852 = vpop.f32.mrf.mxu0
        %v853 = vadd.f32 0.0, %v852
        %854 = vdwg.mxu0
        %856 = vrot.lane.b32.xlu0 %v853, 8
        %v857 = vpop.permute.xlu0 %856
        %v859 = vadd.f32 %v827, %v857
        %vm860 = vcmask 130112
        %861 = vst.msk [vmem:[#allocation5] sm:$0xff] %vm860, %v859
        %862 = vst.msk [vmem:[#allocation3] sm:$0xff] %vm819, %v802
        %v863 = vld [vmem:[#allocation2] sm:$0xff]
        %865 = vrot.lane.b32.xlu0 %v863, 112
        %v866 = vpop.permute.xlu0 %865
        %867 = vrot.lane.b32.xlu0 %v649, 112
        %v868 = vpop.permute.xlu0 %867
        %v869 = vsel %vm683, %v866, 0
        %v871 = vsel %vm683, %v868, 0
        %873 = vmatpush.xpose.msra.mxu0 0.0
        %874 = vmatpush.xpose.msra.mxu0 0.0
        %875 = vmatpush.xpose.msra.mxu0 0.0
        %876 = vmatpush.xpose.msra.mxu0 0.0
        %877 = vmatpush.xpose.msra.mxu0 0.0
        %878 = vmatpush.xpose.msra.mxu0 0.0
        %879 = vmatpush.xpose.msra.mxu0 0.0
        %880 = vmatpush.xpose.msra.mxu0 0.0
        %881 = vmatpush.xpose.msra.mxu0 0.0
        %882 = vmatpush.xpose.msra.mxu0 0.0
        %883 = vmatpush.xpose.msra.mxu0 0.0
        %884 = vmatpush.xpose.msra.mxu0 0.0
        %885 = vmatpush.xpose.msra.mxu0 0.0
        %886 = vmatpush.xpose.msra.mxu0 0.0
        %887 = vmatpush.xpose.msra.mxu0 0.0
        %888 = vmatpush.xpose.msra.mxu0 %v871
        %889 = vmatmul.f32.gmra.mxu0 %v869
        %v890 = vpop.f32.mrf.mxu0
        %v891 = vadd.f32 0.0, %v890
        %892 = vdwg.mxu0
        %v893 = vld [vmem:[#allocation3] sm:$0xff]
        %v894 = vld [vmem:[#allocation4] sm:$0xff]
        %v895 = vsel %vm683, %v891, -inf
        %896 = vmax.xlane.f32.xlu0 %v895
        %v897 = vpop.xlane.xlu0 %896
        %v898 = vmax.f32 %v893, %v897
        %v899 = vsub.f32 %v893, %v898
        %v900 = vmul.f32 %v899, 1.442695
        %v901 = vpow.pop %v900
        %903 = vset.pattern.permute.xlu0 2
        %904 = vperm.xlu0 %903, %v898
        %v905 = vpop.permute.xlu0 %904
        %v907 = vsub.f32 %v891, %v905
        %v908 = vmul.f32 %v907, 1.442695
        %v909 = vpow.pop %v908
        %v910 = vmul.f32 %v901, %v894
        %v911 = vsel %vm683, %v909, 0.0
        %912 = vadd.xlane.f32.xlu0 %v911
        %v913 = vpop.xlane.xlu0 %912
        %v914 = vadd.f32 %v910, %v913
        %vm915 = vcmask 23568
        %916 = vst.msk [vmem:[#allocation4] sm:$0xff] %vm915, %v914
        %v917 = vld [vmem:[#allocation5] sm:$0xff]
        %919 = vset.pattern.permute.xlu0 2
        %920 = vperm.xlu0 %919, %v901
        %v921 = vpop.permute.xlu0 %920
        %v923 = vmul.f32 %v921, %v917
        %924 = vrot.lane.b32.xlu0 %v680, 112
        %v925 = vpop.permute.xlu0 %924
        %v928 = vsel %vm683, %v909, 0
        %930 = vmatpush.msra.mxu0 0.0
        %931 = vmatpush.msra.mxu0 0.0
        %932 = vmatpush.msra.mxu0 0.0
        %933 = vmatpush.msra.mxu0 0.0
        %934 = vmatpush.msra.mxu0 0.0
        %935 = vmatpush.msra.mxu0 0.0
        %936 = vmatpush.msra.mxu0 0.0
        %937 = vmatpush.msra.mxu0 0.0
        %938 = vmatpush.msra.mxu0 0.0
        %939 = vmatpush.msra.mxu0 0.0
        %940 = vmatpush.msra.mxu0 0.0
        %941 = vmatpush.msra.mxu0 0.0
        %942 = vmatpush.msra.mxu0 0.0
        %943 = vmatpush.msra.mxu0 0.0
        %944 = vmatpush.msra.mxu0 0.0
        %945 = vmatpush.msra.mxu0 %v925
        %946 = vmatmul.f32.gmra.mxu0 %v928
        %v947 = vpop.f32.mrf.mxu0
        %v948 = vadd.f32 0.0, %v947
        %949 = vdwg.mxu0
        %951 = vrot.lane.b32.xlu0 %v948, 16
        %v952 = vpop.permute.xlu0 %951
        %v954 = vadd.f32 %v923, %v952
        %vm955 = vcmask 195712
        %956 = vst.msk [vmem:[#allocation5] sm:$0xff] %vm955, %v954
        %957 = vst.msk [vmem:[#allocation3] sm:$0xff] %vm915, %v898
        %v958 = vld [vmem:[#allocation2] sm:$0xff]
        %960 = vrot.lane.b32.xlu0 %v958, 104
        %v961 = vpop.permute.xlu0 %960
        %962 = vrot.lane.b32.xlu0 %v649, 104
        %v963 = vpop.permute.xlu0 %962
        %v964 = vsel %vm683, %v961, 0
        %v966 = vsel %vm683, %v963, 0
        %968 = vmatpush.xpose.msra.mxu0 0.0
        %969 = vmatpush.xpose.msra.mxu0 0.0
        %970 = vmatpush.xpose.msra.mxu0 0.0
        %971 = vmatpush.xpose.msra.mxu0 0.0
        %972 = vmatpush.xpose.msra.mxu0 0.0
        %973 = vmatpush.xpose.msra.mxu0 0.0
        %974 = vmatpush.xpose.msra.mxu0 0.0
        %975 = vmatpush.xpose.msra.mxu0 0.0
        %976 = vmatpush.xpose.msra.mxu0 0.0
        %977 = vmatpush.xpose.msra.mxu0 0.0
        %978 = vmatpush.xpose.msra.mxu0 0.0
        %979 = vmatpush.xpose.msra.mxu0 0.0
        %980 = vmatpush.xpose.msra.mxu0 0.0
        %981 = vmatpush.xpose.msra.mxu0 0.0
        %982 = vmatpush.xpose.msra.mxu0 0.0
        %983 = vmatpush.xpose.msra.mxu0 %v966
        %984 = vmatmul.f32.gmra.mxu0 %v964
        %v985 = vpop.f32.mrf.mxu0
        %v986 = vadd.f32 0.0, %v985
        %987 = vdwg.mxu0
        %v988 = vld [vmem:[#allocation3] sm:$0xff]
        %v989 = vld [vmem:[#allocation4] sm:$0xff]
        %v990 = vsel %vm683, %v986, -inf
        %991 = vmax.xlane.f32.xlu0 %v990
        %v992 = vpop.xlane.xlu0 %991
        %v993 = vmax.f32 %v988, %v992
        %v994 = vsub.f32 %v988, %v993
        %v995 = vmul.f32 %v994, 1.442695
        %v996 = vpow.pop %v995
        %998 = vset.pattern.permute.xlu0 3
        %999 = vperm.xlu0 %998, %v993
        %v1000 = vpop.permute.xlu0 %999
        %v1002 = vsub.f32 %v986, %v1000
        %v1003 = vmul.f32 %v1002, 1.442695
        %v1004 = vpow.pop %v1003
        %v1005 = vmul.f32 %v996, %v989
        %v1006 = vsel %vm683, %v1004, 0.0
        %1007 = vadd.xlane.f32.xlu0 %v1006
        %v1008 = vpop.xlane.xlu0 %1007
        %v1009 = vadd.f32 %v1005, %v1008
        %vm1010 = vcmask 31768
        %1011 = vst.msk [vmem:[#allocation4] sm:$0xff] %vm1010, %v1009
        %v1012 = vld [vmem:[#allocation5] sm:$0xff]
        %1014 = vset.pattern.permute.xlu0 3
        %1015 = vperm.xlu0 %1014, %v996
        %v1016 = vpop.permute.xlu0 %1015
        %v1018 = vmul.f32 %v1016, %v1012
        %1019 = vrot.lane.b32.xlu0 %v680, 104
        %v1020 = vpop.permute.xlu0 %1019
        %v1023 = vsel %vm683, %v1004, 0
        %1025 = vmatpush.msra.mxu0 0.0
        %1026 = vmatpush.msra.mxu0 0.0
        %1027 = vmatpush.msra.mxu0 0.0
        %1028 = vmatpush.msra.mxu0 0.0
        %1029 = vmatpush.msra.mxu0 0.0
        %1030 = vmatpush.msra.mxu0 0.0
        %1031 = vmatpush.msra.mxu0 0.0
        %1032 = vmatpush.msra.mxu0 0.0
        %1033 = vmatpush.msra.mxu0 0.0
        %1034 = vmatpush.msra.mxu0 0.0
        %1035 = vmatpush.msra.mxu0 0.0
        %1036 = vmatpush.msra.mxu0 0.0
        %1037 = vmatpush.msra.mxu0 0.0
        %1038 = vmatpush.msra.mxu0 0.0
        %1039 = vmatpush.msra.mxu0 0.0
        %1040 = vmatpush.msra.mxu0 %v1020
        %1041 = vmatmul.f32.gmra.mxu0 %v1023
        %v1042 = vpop.f32.mrf.mxu0
        %v1043 = vadd.f32 0.0, %v1042
        %1044 = vdwg.mxu0
        %1046 = vrot.lane.b32.xlu0 %v1043, 24
        %v1047 = vpop.permute.xlu0 %1046
        %v1049 = vadd.f32 %v1018, %v1047
        %vm1050 = vcmask 261312
        %1051 = vst.msk [vmem:[#allocation5] sm:$0xff] %vm1050, %v1049
        %1052 = vst.msk [vmem:[#allocation3] sm:$0xff] %vm1010, %v993
        // Predicated region
        $region97: #{tpu_custom_call.1} parent=63 // pred_check
          %p1053 = pneg %p575
        $region98: #{tpu_custom_call.1} parent=63 // pred_check_branch
          %1055 = sbr.rel (%p1053) target = $region100
        $region99: #{tpu_custom_call.1} parent=63 // pred_region
          %v1056 = vld [vmem:[#allocation4] sm:$0xff]
          %v1057 = vrcp.pop %v1056
          %v1058 = vmul.f32 %v1056, %v1057
          %v1059 = vsub.f32 1.0, %v1058
          %v1060 = vmul.f32 %v1057, %v1059
          %v1061 = vadd.f32 %v1057, %v1060
          %vm1062 = vweird.f32 %v1056
          %vm1063 = vweird.f32 %v1057
          %vm1064 = vmor %vm1062, %vm1063
          %v1065 = vsel %vm1064, %v1057, %v1061
          %v1066 = vand.u32 2147483647, %v1056
          %vm1067 = vcmp.eq.f32.partialorder %v1066, 8.507059e+37
          %v1068 = vand.u32 %v1056, 2147483648
          %v1069 = vor.u32 1.1754944e-38, %v1068
          %v1070 = vsel %vm1067, %v1069, %v1065
          %v1071 = vld [vmem:[#allocation5] sm:$0xff]
          %1073 = vset.pattern.permute.xlu0 0
          %1074 = vperm.xlu0 %1073, %v1070
          %v1075 = vpop.permute.xlu0 %1074
          %v1077 = vmul.f32 %v1071, %v1075
          %1078 = vst.msk [vmem:[#allocation5] sm:$0xff] %vm683, %v1077
          %v1079 = vld [vmem:[#allocation4] sm:$0xff]
          %v1080 = vrcp.pop %v1079
          %v1081 = vmul.f32 %v1079, %v1080
          %v1082 = vsub.f32 1.0, %v1081
          %v1083 = vmul.f32 %v1080, %v1082
          %v1084 = vadd.f32 %v1080, %v1083
          %vm1085 = vweird.f32 %v1079
          %vm1086 = vweird.f32 %v1080
          %vm1087 = vmor %vm1085, %vm1086
          %v1088 = vsel %vm1087, %v1080, %v1084
          %v1089 = vand.u32 2147483647, %v1079
          %vm1090 = vcmp.eq.f32.partialorder %v1089, 8.507059e+37
          %v1091 = vand.u32 %v1079, 2147483648
          %v1092 = vor.u32 1.1754944e-38, %v1091
          %v1093 = vsel %vm1090, %v1092, %v1088
          %v1094 = vld [vmem:[#allocation5] sm:$0xff]
          %1096 = vset.pattern.permute.xlu0 1
          %1097 = vperm.xlu0 %1096, %v1093
          %v1098 = vpop.permute.xlu0 %1097
          %v1100 = vmul.f32 %v1094, %v1098
          %1101 = vst.msk [vmem:[#allocation5] sm:$0xff] %vm860, %v1100
          %v1102 = vld [vmem:[#allocation4] sm:$0xff]
          %v1103 = vrcp.pop %v1102
          %v1104 = vmul.f32 %v1102, %v1103
          %v1105 = vsub.f32 1.0, %v1104
          %v1106 = vmul.f32 %v1103, %v1105
          %v1107 = vadd.f32 %v1103, %v1106
          %vm1108 = vweird.f32 %v1102
          %vm1109 = vweird.f32 %v1103
          %vm1110 = vmor %vm1108, %vm1109
          %v1111 = vsel %vm1110, %v1103, %v1107
          %v1112 = vand.u32 2147483647, %v1102
          %vm1113 = vcmp.eq.f32.partialorder %v1112, 8.507059e+37
          %v1114 = vand.u32 %v1102, 2147483648
          %v1115 = vor.u32 1.1754944e-38, %v1114
          %v1116 = vsel %vm1113, %v1115, %v1111
          %v1117 = vld [vmem:[#allocation5] sm:$0xff]
          %1119 = vset.pattern.permute.xlu0 2
          %1120 = vperm.xlu0 %1119, %v1116
          %v1121 = vpop.permute.xlu0 %1120
          %v1123 = vmul.f32 %v1117, %v1121
          %1124 = vst.msk [vmem:[#allocation5] sm:$0xff] %vm955, %v1123
          %v1125 = vld [vmem:[#allocation4] sm:$0xff]
          %v1126 = vrcp.pop %v1125
          %v1127 = vmul.f32 %v1125, %v1126
          %v1128 = vsub.f32 1.0, %v1127
          %v1129 = vmul.f32 %v1126, %v1128
          %v1130 = vadd.f32 %v1126, %v1129
          %vm1131 = vweird.f32 %v1125
          %vm1132 = vweird.f32 %v1126
          %vm1133 = vmor %vm1131, %vm1132
          %v1134 = vsel %vm1133, %v1126, %v1130
          %v1135 = vand.u32 2147483647, %v1125
          %vm1136 = vcmp.eq.f32.partialorder %v1135, 8.507059e+37
          %v1137 = vand.u32 %v1125, 2147483648
          %v1138 = vor.u32 1.1754944e-38, %v1137
          %v1139 = vsel %vm1136, %v1138, %v1134
          %v1140 = vld [vmem:[#allocation5] sm:$0xff]
          %1142 = vset.pattern.permute.xlu0 3
          %1143 = vperm.xlu0 %1142, %v1139
          %v1144 = vpop.permute.xlu0 %1143
          %v1146 = vmul.f32 %v1140, %v1144
          %1147 = vst.msk [vmem:[#allocation5] sm:$0xff] %vm1050, %v1146
          %v1148 = vld [vmem:[#allocation5] sm:$0xff]
          %v1149 = vld [vmem:[#allocation17] sm:$0xff]
          %v1150 = vld [vmem:[#allocation17 + $0x8] sm:$0xff]
          %v1151 = vld [vmem:[#allocation17 + $0x10] sm:$0xff]
          %v1152 = vld [vmem:[#allocation17 + $0x18] sm:$0xff]
          %v1153 = vld [vmem:[%s10] sm:$0x1]
          %v1155 = vperm.slane %v1153, 0
          %v1158 = vsel %vm627, %v1148, 0
          %1160 = vmatpush.msra.mxu0 0.0
          %1161 = vmatpush.msra.mxu0 0.0
          %1162 = vmatpush.msra.mxu0 0.0
          %1163 = vmatpush.msra.mxu0 0.0
          %1164 = vmatpush.msra.mxu0 0.0
          %1165 = vmatpush.msra.mxu0 0.0
          %1166 = vmatpush.msra.mxu0 0.0
          %1167 = vmatpush.msra.mxu0 0.0
          %1168 = vmatpush.msra.mxu0 0.0
          %1169 = vmatpush.msra.mxu0 0.0
          %1170 = vmatpush.msra.mxu0 0.0
          %1171 = vmatpush.msra.mxu0 0.0
          %1172 = vmatpush.msra.mxu0 %v1152
          %1173 = vmatpush.msra.mxu0 %v1151
          %1174 = vmatpush.msra.mxu0 %v1150
          %1175 = vmatpush.msra.mxu0 %v1149
          %1176 = vmatmul.f32.gmra.mxu0 %v1158
          %v1177 = vpop.f32.mrf.mxu0
          %v1178 = vadd.f32 %v1155, %v1177
          %1179 = vdwg.mxu0
          %1180 = vst.msk [vmem:[%s574] sm:$0xff] %vm627, %v1178
        $region100: #{tpu_custom_call.1} parent=63 // pred_fallthru
          _
        %s1181 = sand.u32 %s314, 1
        %s1182 = scalar_lea.sflag [#allocation8], %s1181
        %s1183 = sand.u32 %s314, 1
        %s1184 = smul.addr %s1183, 8
        %s1185 = scalar_lea.vmem [#allocation18], %s1184
        // Predicated region
        $region101: #{tpu_custom_call.1} parent=63 // pred_check
          %p1186 = pneg %p324
        $region102: #{tpu_custom_call.1} parent=63 // pred_check_branch
          %1188 = sbr.rel (%p1186) target = $region104
        $region103: #{tpu_custom_call.1} parent=63 // pred_region
          %1190 = vsyncadd %s1182, 0
          %s1191 = sadd.s32 %s39, %s38
          %s1192 = smul.addr %s1191, 8
          %s1193 = scalar_lea.hbm %s11, %s1192
          %s1195 = sshll.u32 %s1185, 4
          %s1196 = int_to_ptr.vmem [resolvable:$true] %s1195
          %s1197 = sshll.u32 %s1193, 4
          %s1198 = int_to_ptr.hbm [resolvable:$true] %s1197
          %1200 = dma.vmem_to_hbm [thread:$0]  %s1196, 128, %s1198, %s1182
        $region104: #{tpu_custom_call.1} parent=63 // pred_fallthru
          _
      $region64: #{tpu_custom_call.1} parent=5 // pred_fallthru
        _
      %p1201 = scmp.le.s32.totalorder 2, %s28
      // Predicated region
      $region105: #{tpu_custom_call.1} parent=5 // pred_check
        %p1202 = pneg %p1201
      $region106: #{tpu_custom_call.1} parent=5 // pred_check_branch
        %1204 = sbr.rel (%p1202) target = $region108
      $region107: #{tpu_custom_call.1} parent=5 // pred_region
        %s1205 = ssub.s32 %s28, 2
        // Predicated region
        $region109: #{tpu_custom_call.1} parent=107 // pred_check
          %p1206 = pneg %p330
        $region110: #{tpu_custom_call.1} parent=107 // pred_check_branch
          %1208 = sbr.rel (%p1206) target = $region112
        $region111: #{tpu_custom_call.1} parent=107 // pred_region
          %s1209 = sand.u32 %s315, 1
          %s1210 = scalar_lea.sflag [#allocation8], %s1209
          %s1211 = sand.u32 %s315, 1
          %s1212 = smul.addr %s1211, 8
          %s1213 = scalar_lea.vmem [#allocation18], %s1212
          %1215 = dma.done %s1210, 128
        $region112: #{tpu_custom_call.1} parent=107 // pred_fallthru
          _
      $region108: #{tpu_custom_call.1} parent=5 // pred_fallthru
        _
    $region6: #{tpu_custom_call.1} parent=1 // loop_footer
      %s32 = sadd.s32 1, %s28
    $region7: #{tpu_custom_call.1} parent=1 // loop_footer_branch
      %27 = sbr.rel target = $region3
    $region8: #{tpu_custom_call.1} parent=1 // loop_exit
      _
    %1216 = vsyncpa [#allocation7], 1
    %s1217 = scalar_lea.sflag [#allocation7], 1
    %1218 = vsyncpa %s1217, 1
    %1219 = vsyncpa [#allocation10], 1
    %s1220 = scalar_lea.sflag [#allocation10], 1
    %1221 = vsyncpa %s1220, 1
    %1222 = vsyncpa [#allocation13], 1
    %1223 = vsyncpa [#allocation16], 1
    %1224 = vsyncpa [#allocation8], 1
    %s1225 = scalar_lea.sflag [#allocation8], 1
    %1226 = vsyncpa %s1225, 1

</llo_original>
